<compile_context>
chip_gen: v5e
topology: v5e:2x2
jax: 0.10.0
libtpu: 0.0.40
codegen_flags: <defaults>
</compile_context>

<pallas_src>
import functools
import math

import jax
import jax.numpy as jnp
import numpy as np
from jax.experimental import pallas as pl
from jax.experimental.pallas import tpu as pltpu


def _additive_attn_kernel(vl_ref, q_ref, k_ref, v_ref, wq_ref, wk_ref, wv_ref,
                          out_ref, kh_ref, *, h_chunk, fast):
    # Blocks: vl (GB, TQ) i32, q (GB, TQ, Dq), k (GB, Kp, Dk), v (GB, Kp, Dvp),
    #         out (GB, TQ, Dvp); scratch kh (GB, H, Kp) f32.
    GB, TQ, Dq = q_ref.shape
    _, Kp, Dk = k_ref.shape
    H = wq_ref.shape[1]
    qt = pl.program_id(1)

    tanh_dtype = jnp.bfloat16 if fast else jnp.float32   # bf16 EUP on v6e/v7x
    mm_dtype = jnp.bfloat16 if fast else v_ref.dtype     # bf16 MXU on v6e/v7x

    # --- key projection: qt-invariant, cached in VMEM scratch (computed once
    #     per batch group; qt axis is "arbitrary" so qt==0 runs first per g) ---
    @pl.when(qt == 0)
    def _():
        k2 = k_ref[...].reshape(GB * Kp, Dk)
        kh = jnp.dot(k2, wk_ref[...], preferred_element_type=jnp.float32)
        kh_ref[...] = jnp.transpose(kh.reshape(GB, Kp, H), (0, 2, 1))  # (GB,H,Kp)

    # --- query projection: batch group folded into the matmul M dim (MXU) ---
    q2 = q_ref[...].reshape(GB * TQ, Dq)
    qh = jnp.dot(q2, wq_ref[...], preferred_element_type=jnp.float32)  # (GB*TQ,H)
    qh_t = jnp.transpose(qh.reshape(GB, TQ, H), (0, 2, 1))             # (GB,H,TQ)
    kh_t = kh_ref[...]                                                 # (GB,H,Kp)
    wv = wv_ref[...].astype(jnp.float32)                               # (1, H)

    # --- additive scores accumulated over H-chunks (no rank-3 (Q,K,H)) ---
    scores = jnp.zeros((GB, TQ, Kp), jnp.float32)
    for h0 in range(0, H, h_chunk):
        h1 = min(h0 + h_chunk, H)
        hc = h1 - h0
        a = qh_t[:, h0:h1, :][:, :, :, None]              # (GB, hc, TQ, 1)
        b = kh_t[:, h0:h1, :][:, :, None, :]              # (GB, hc, 1, Kp)
        t = jnp.tanh((a + b).astype(tanh_dtype))          # EUP; Kp on lanes
        w = wv[:, h0:h1].reshape(1, hc, 1, 1).astype(tanh_dtype)
        scores = scores + jnp.sum((t * w).astype(jnp.float32), axis=1)

    # --- masking (torch masked_softmax: invalid -> -1e6), fully vectorized:
    #     one small 2-D iota, one compare + select off a (GB, TQ) VMEM block ---
    thr = vl_ref[...][:, :, None]                                   # (GB,TQ,1)
    col = jax.lax.broadcasted_iota(jnp.int32, (TQ, Kp), 1)[None]    # (1,TQ,Kp)
    scores = jnp.where(col < thr, scores, jnp.float32(-1e6))

    # --- softmax over keys; normalize AFTER the value matmul ---
    m = jnp.max(scores, axis=-1, keepdims=True)
    e = jnp.exp(scores - m)                                         # (GB,TQ,Kp)
    s = jnp.sum(e, axis=-1, keepdims=True)                          # (GB,TQ,1)
    out = jnp.einsum('gqk,gkd->gqd', e.astype(mm_dtype),
                     v_ref[...].astype(mm_dtype),
                     preferred_element_type=jnp.float32)            # (GB,TQ,Dvp)
    out = out * pl.reciprocal(s, approx=fast)
    out_ref[...] = out.astype(out_ref.dtype)


def _round_up(x, m):
    return ((x + m - 1) // m) * m


def _bf16_eup_ok():
    """bf16 EUP/VPU (2x tanh) exists on v6e/v7x, not on v5e and older."""
    try:
        kind = jax.devices()[0].device_kind.lower()
    except Exception:
        return False
    return ("v6" in kind) or ("v7" in kind)


def _vmem_limit_bytes():
    """Generation-aware scoped-VMEM cap (~half of physical, max 64 MiB)."""
    cap = None
    try:
        cap = int(pltpu.get_tpu_info().vmem_capacity_bytes)
    except Exception:
        cap = None
    if cap is None:
        try:
            kind = jax.devices()[0].device_kind.lower()
        except Exception:
            kind = ""
        cap = 64 * 1024 * 1024 if "v7" in kind else 128 * 1024 * 1024
    return max(16 * 1024 * 1024, min(cap // 2, 64 * 1024 * 1024))


def _pick_group(batch, target=8):
    """Batch-group size: a divisor of `batch` that keeps the (GB, TQ)
    valid_lens block layout-legal (GB % 8 == 0 or GB == batch), preferring
    >= 2 groups so both v7x TensorCores get work."""
    legal = [d for d in range(1, batch + 1)
             if batch % d == 0 and (d % 8 == 0 or d == batch)]
    multi = [d for d in legal if d <= target and batch // d >= 2]
    if multi:
        return max(multi)
    capped = [d for d in legal if d <= target]
    if capped:
        return max(capped)
    return min(legal)


def _pick_q_tile(q, cap=128):
    """TQ == Q (block == full dim) or a multiple of 128 dividing Q, so TQ is a
    legal lane dim (valid_lens block) and sublane dim (q/out blocks)."""
    if q <= cap:
        return q
    for t in range(cap - cap % 128, 0, -128):
        if t and q % t == 0:
            return t
    return q


def _pick_h_chunk(H, GB, TQ, Kp, requested=8, max_unroll=8, temp_bytes=2 << 20):
    """Bound the (GB, hc, TQ, Kp) f32 temporary and cap the static unroll."""
    vmem_cap = max(1, temp_bytes // (GB * TQ * Kp * 4))
    unroll_floor = -(-H // max_unroll)
    hc = min(max(requested, unroll_floor), H)
    if vmem_cap < hc:
        hc = vmem_cap   # favor the VMEM bound; see fori_loop TODO at top.
    return max(1, hc)


def additive_attention(queries, keys, values, w_q, w_k, w_v, valid_lens=None,
                       *, group_target=8, q_tile_cap=128, h_chunk=8):
    B, Q, Dq = queries.shape
    _, K, Dk = keys.shape
    _, _, Dv = values.shape
    H = w_q.shape[1]

    GB = _pick_group(B, group_target)
    TQ = _pick_q_tile(Q, q_tile_cap)

    # Lane-dense key axis and output feature axis (pad to multiples of 128).
    # Padded key columns are inert: mask uses the ORIGINAL K, values are 0.
    Kp = _round_up(K, 128)
    Dvp = _round_up(Dv, 128)
    keys_p = keys if Kp == K else jnp.pad(keys, ((0, 0), (0, Kp - K), (0, 0)))
    values_p = values
    if Kp != K or Dvp != Dv:
        values_p = jnp.pad(values, ((0, 0), (0, Kp - K), (0, Dvp - Dv)))

    # valid_lens -> (B, Q) int32 VMEM input (one vectorized compare in-kernel).
    # NOTE: rows with valid_len == 0 get uniform weights over the PADDED key
    # axis (matches the -1e6 masked_softmax convention, not a hard mask).
    if valid_lens is None:
        vl = jnp.full((B, Q), K, dtype=jnp.int32)
    elif valid_lens.ndim == 1:
        vl = jnp.broadcast_to(valid_lens.astype(jnp.int32)[:, None], (B, Q))
    else:
        vl = valid_lens.astype(jnp.int32).reshape(B, Q)

    fast = _bf16_eup_ok()
    vmem_limit = _vmem_limit_bytes()
    hc = _pick_h_chunk(H, GB, TQ, Kp, h_chunk)

    # Rough per-step VMEM footprint; shrink the batch group if it would
    # overrun the budget (matters mostly on v7x's 64 MiB).
    def footprint(gb, hcv):
        io = 2 * gb * (TQ * Dq + Kp * Dk + Kp * Dvp + TQ * Dvp) * 4
        scratch = gb * H * Kp * 4
        interm = gb * TQ * Kp * 4 * 4 + gb * hcv * TQ * Kp * 4
        return io + scratch + interm

    while GB > 1 and footprint(GB, hc) > int(0.6 * vmem_limit):
        smaller = [d for d in range(1, GB) if B % d == 0 and d % 8 == 0]
        if not smaller:
            break
        GB = max(smaller)
        hc = _pick_h_chunk(H, GB, TQ, Kp, h_chunk)

    kernel = functools.partial(_additive_attn_kernel, h_chunk=hc, fast=fast)

    out = pl.pallas_call(
        kernel,
        out_shape=jax.ShapeDtypeStruct((B, Q, Dvp), values.dtype),
        grid_spec=pltpu.PrefetchScalarGridSpec(
            num_scalar_prefetch=0,
            grid=(B // GB, Q // TQ),
            in_specs=[
                pl.BlockSpec((GB, TQ), lambda g, qt: (g, qt)),          # valid_lens
                pl.BlockSpec((GB, TQ, Dq), lambda g, qt: (g, qt, 0)),   # queries
                pl.BlockSpec((GB, Kp, Dk), lambda g, qt: (g, 0, 0)),    # keys (qt-const)
                pl.BlockSpec((GB, Kp, Dvp), lambda g, qt: (g, 0, 0)),   # values (qt-const)
                pl.BlockSpec((Dq, H), lambda g, qt: (0, 0)),            # W_q
                pl.BlockSpec((Dk, H), lambda g, qt: (0, 0)),            # W_k
                pl.BlockSpec((1, H), lambda g, qt: (0, 0)),             # w_v
            ],
            out_specs=pl.BlockSpec((GB, TQ, Dvp), lambda g, qt: (g, qt, 0)),
            scratch_shapes=[pltpu.VMEM((GB, H, Kp), jnp.float32)],      # kh cache
        ),
        compiler_params=pltpu.CompilerParams(
            # g is megacore-parallel; qt is "arbitrary" because the key
            # projection is cached in scratch under @pl.when(qt == 0).
            dimension_semantics=("parallel", "arbitrary"),
            vmem_limit_bytes=vmem_limit),
    )(vl, queries, keys_p, values_p, w_q, w_k, w_v)

    return out if Dvp == Dv else out[:, :, :Dv]


def _ref_additive_attention(queries, keys, values, w_q, w_k, w_v, valid_lens):
    # Pure-JAX reference mirroring the PyTorch module (eval mode).
    q = queries @ w_q                                        # (B, Q, H)
    k = keys @ w_k                                           # (B, K, H)
    feat = jnp.tanh(q[:, :, None, :] + k[:, None, :, :])     # (B, Q, K, H)
    scores = jnp.einsum('bqkh,h->bqk', feat, w_v[0])         # (B, Q, K)
    B, Q, K = scores.shape
    if valid_lens is None:
        vl = jnp.full((B, Q), K, dtype=jnp.int32)
    elif valid_lens.ndim == 1:
        vl = jnp.broadcast_to(valid_lens.astype(jnp.int32)[:, None], (B, Q))
    else:
        vl = valid_lens.astype(jnp.int32)
    mask = jnp.arange(K)[None, None, :] < vl[:, :, None]
    scores = jnp.where(mask, scores, -1e6)
    probs = jax.nn.softmax(scores, axis=-1)
    return jnp.einsum('bqk,bkd->bqd', probs, values)


if __name__ == "__main__":
    B, Q, K = 4, 8, 10
    query_size, key_size, hidden_size, value_size = 20, 16, 32, 4

    key = jax.random.PRNGKey(0)
    kq, kk, kv, kwq, kwk, kwv, kvl = jax.random.split(key, 7)

    queries = jax.random.normal(kq, (B, Q, query_size), dtype=jnp.float32)
    keys = jax.random.normal(kk, (B, K, key_size), dtype=jnp.float32)
    values = jax.random.normal(kv, (B, K, value_size), dtype=jnp.float32)
    valid_lens = jnp.array([2, 6, 3, 10], dtype=jnp.int32)

    # nn.Linear-style init: U(-1/sqrt(fan_in), 1/sqrt(fan_in)), stored transposed.
    bq = 1.0 / math.sqrt(query_size)
    bk = 1.0 / math.sqrt(key_size)
    bv = 1.0 / math.sqrt(hidden_size)
    w_q = jax.random.uniform(kwq, (query_size, hidden_size), jnp.float32, -bq, bq)
    w_k = jax.random.uniform(kwk, (key_size, hidden_size), jnp.float32, -bk, bk)
    w_v = jax.random.uniform(kwv, (1, hidden_size), jnp.float32, -bv, bv)

    # Tolerances: tight on the f32 path (v5e), loose on the bf16 tanh / bf16
    # MXU / approx-reciprocal path (v6e/v7x).
    if _bf16_eup_ok():
        rtol, atol = 5e-2, 3e-2
    else:
        rtol, atol = 3e-4, 1e-4

    # 1) per-batch (1-D) valid_lens.
    out = jax.block_until_ready(
        additive_attention(queries, keys, values, w_q, w_k, w_v, valid_lens))
    ref = _ref_additive_attention(queries, keys, values, w_q, w_k, w_v,
                                  valid_lens)
    np.testing.assert_allclose(np.asarray(out), np.asarray(ref),
                               rtol=rtol, atol=atol)

    # 2) valid_lens=None -> plain softmax (padded key columns stay inert).
    out_n = jax.block_until_ready(
        additive_attention(queries, keys, values, w_q, w_k, w_v, None))
    ref_n = _ref_additive_attention(queries, keys, values, w_q, w_k, w_v, None)
    np.testing.assert_allclose(np.asarray(out_n), np.asarray(ref_n),
                               rtol=rtol, atol=atol)

    # 3) per-query (2-D) valid_lens.
    vl2 = jax.random.randint(kvl, (B, Q), 1, K + 1).astype(jnp.int32)
    out_2 = jax.block_until_ready(
        additive_attention(queries, keys, values, w_q, w_k, w_v, vl2))
    ref_2 = _ref_additive_attention(queries, keys, values, w_q, w_k, w_v, vl2)
    np.testing.assert_allclose(np.asarray(out_2), np.asarray(ref_2),
                               rtol=rtol, atol=atol)

    print("KERNEL_OK")
</pallas_src>

<mosaic_0001>
module attributes {stable_mosaic.version = 11 : i64} {
  func.func @_additive_attn_kernel(%arg0: i32, %arg1: i32, %arg2: memref<4x8xi32, #tpu.memory_space<vmem>>, %arg3: memref<4x8x20xf32, #tpu.memory_space<vmem>>, %arg4: memref<4x128x16xf32, #tpu.memory_space<vmem>>, %arg5: memref<4x128x128xf32, #tpu.memory_space<vmem>>, %arg6: memref<20x32xf32, #tpu.memory_space<vmem>>, %arg7: memref<16x32xf32, #tpu.memory_space<vmem>>, %arg8: memref<1x32xf32, #tpu.memory_space<vmem>>, %arg9: memref<4x8x128xf32, #tpu.memory_space<vmem>>, %arg10: memref<4x32x128xf32, #tpu.memory_space<vmem>>) attributes {dimension_semantics = [#tpu.dimension_semantics<parallel>, #tpu.dimension_semantics<arbitrary>], iteration_bounds = array<i64: 1, 1>, scalar_prefetch = 0 : i64, scratch_operands = 1 : i64, tpu.core_type = #tpu.core_type<tc>, window_params = [{transform_indices = @transform_0, window_bounds = array<i64: 4, 8>}, {transform_indices = @transform_1, window_bounds = array<i64: 4, 8, 20>}, {transform_indices = @transform_2, window_bounds = array<i64: 4, 128, 16>}, {transform_indices = @transform_3, window_bounds = array<i64: 4, 128, 128>}, {pipeline_mode = #tpu.pipeline_mode<synchronous>, transform_indices = @transform_4, window_bounds = array<i64: 20, 32>}, {pipeline_mode = #tpu.pipeline_mode<synchronous>, transform_indices = @transform_5, window_bounds = array<i64: 16, 32>}, {pipeline_mode = #tpu.pipeline_mode<synchronous>, transform_indices = @transform_6, window_bounds = array<i64: 1, 32>}, {transform_indices = @transform_7, window_bounds = array<i64: 4, 8, 128>}]} {
    %c0_i32 = arith.constant 0 : i32
    %0 = arith.cmpi eq, %arg1, %c0_i32 : i32
    %1 = arith.extui %0 : i1 to i32
    %c0_i32_0 = arith.constant 0 : i32
    %2 = arith.cmpi ne, %1, %c0_i32_0 : i32
    scf.if %2 {
      %c0_27 = arith.constant 0 : index
      %c0_28 = arith.constant 0 : index
      %c0_29 = arith.constant 0 : index
      %90 = vector.load %arg4[%c0_27, %c0_28, %c0_29] : memref<4x128x16xf32, #tpu.memory_space<vmem>>, vector<4x128x16xf32>
      %91 = vector.shape_cast %90 : vector<4x128x16xf32> to vector<512x16xf32>
      %c0_30 = arith.constant 0 : index
      %c0_31 = arith.constant 0 : index
      %92 = vector.load %arg7[%c0_30, %c0_31] : memref<16x32xf32, #tpu.memory_space<vmem>>, vector<16x32xf32>
      %cst_32 = arith.constant dense<0.000000e+00> : vector<512x32xf32>
      %93 = tpu.matmul %91, %92, %cst_32 {dimension_numbers = #tpu.dot_dimension_numbers<[1], [0], [0], [1], [0, 0, 1, 1], [], []>} : vector<512x16xf32>, vector<16x32xf32>, vector<512x32xf32> -> vector<512x32xf32>
      %94 = vector.shape_cast %93 : vector<512x32xf32> to vector<4x128x32xf32>
      %95 = tpu.transpose %94, [0, 2, 1] : vector<4x128x32xf32> -> vector<4x32x128xf32>
      %c0_33 = arith.constant 0 : index
      %c0_34 = arith.constant 0 : index
      %c0_35 = arith.constant 0 : index
      %96 = vector.load %arg10[%c0_33, %c0_34, %c0_35] : memref<4x32x128xf32, #tpu.memory_space<vmem>>, vector<4x32x128xf32>
      tpu.vector_store %arg10[%c0_33, %c0_34, %c0_35], %95 {strides = array<i32>} : memref<4x32x128xf32, #tpu.memory_space<vmem>>, vector<4x32x128xf32>,
    } else {
    }
    %c0 = arith.constant 0 : index
    %c0_1 = arith.constant 0 : index
    %c0_2 = arith.constant 0 : index
    %3 = vector.load %arg3[%c0, %c0_1, %c0_2] : memref<4x8x20xf32, #tpu.memory_space<vmem>>, vector<4x8x20xf32>
    %4 = vector.shape_cast %3 : vector<4x8x20xf32> to vector<32x20xf32>
    %c0_3 = arith.constant 0 : index
    %c0_4 = arith.constant 0 : index
    %5 = vector.load %arg6[%c0_3, %c0_4] : memref<20x32xf32, #tpu.memory_space<vmem>>, vector<20x32xf32>
    %cst = arith.constant dense<0.000000e+00> : vector<32x32xf32>
    %6 = tpu.matmul %4, %5, %cst {dimension_numbers = #tpu.dot_dimension_numbers<[1], [0], [0], [1], [0, 0, 1, 1], [], []>} : vector<32x20xf32>, vector<20x32xf32>, vector<32x32xf32> -> vector<32x32xf32>
    %7 = vector.shape_cast %6 : vector<32x32xf32> to vector<4x8x32xf32>
    %8 = tpu.transpose %7, [0, 2, 1] : vector<4x8x32xf32> -> vector<4x32x8xf32>
    %c0_5 = arith.constant 0 : index
    %c0_6 = arith.constant 0 : index
    %c0_7 = arith.constant 0 : index
    %9 = vector.load %arg10[%c0_5, %c0_6, %c0_7] : memref<4x32x128xf32, #tpu.memory_space<vmem>>, vector<4x32x128xf32>
    %c0_8 = arith.constant 0 : index
    %c0_9 = arith.constant 0 : index
    %10 = vector.load %arg8[%c0_8, %c0_9] : memref<1x32xf32, #tpu.memory_space<vmem>>, vector<1x32xf32>
    %cst_10 = arith.constant 0.000000e+00 : f32
    %11 = vector.broadcast %cst_10 : f32 to vector<4x8x128xf32>
    %12 = vector.extract_strided_slice %8 {offsets = [0, 0, 0], sizes = [4, 8, 8], strides = [1, 1, 1]} : vector<4x32x8xf32> to vector<4x8x8xf32>
    %13 = vector.shape_cast %12 : vector<4x8x8xf32> to vector<4x8x8x1xf32>
    %14 = vector.extract_strided_slice %9 {offsets = [0, 0, 0], sizes = [4, 8, 128], strides = [1, 1, 1]} : vector<4x32x128xf32> to vector<4x8x128xf32>
    %15 = vector.shape_cast %14 : vector<4x8x128xf32> to vector<4x8x1x128xf32>
    %16 = vector.broadcast %13 : vector<4x8x8x1xf32> to vector<4x8x8x128xf32>
    %17 = vector.broadcast %15 : vector<4x8x1x128xf32> to vector<4x8x8x128xf32>
    %18 = arith.addf %16, %17 : vector<4x8x8x128xf32>
    %19 = math.tanh %18 : vector<4x8x8x128xf32>
    %20 = vector.extract_strided_slice %10 {offsets = [0, 0], sizes = [1, 8], strides = [1, 1]} : vector<1x32xf32> to vector<1x8xf32>
    %21 = vector.shape_cast %20 : vector<1x8xf32> to vector<1x8x1x1xf32>
    %22 = vector.broadcast %21 : vector<1x8x1x1xf32> to vector<4x8x8x128xf32>
    %23 = arith.mulf %19, %22 : vector<4x8x8x128xf32>
    %cst_11 = arith.constant dense<0.000000e+00> : vector<4x8x128xf32>
    %24 = vector.multi_reduction <add>, %23, %cst_11 [1] : vector<4x8x8x128xf32> to vector<4x8x128xf32>
    %25 = arith.addf %11, %24 : vector<4x8x128xf32>
    %26 = vector.extract_strided_slice %8 {offsets = [0, 8, 0], sizes = [4, 8, 8], strides = [1, 1, 1]} : vector<4x32x8xf32> to vector<4x8x8xf32>
    %27 = vector.shape_cast %26 : vector<4x8x8xf32> to vector<4x8x8x1xf32>
    %28 = vector.extract_strided_slice %9 {offsets = [0, 8, 0], sizes = [4, 8, 128], strides = [1, 1, 1]} : vector<4x32x128xf32> to vector<4x8x128xf32>
    %29 = vector.shape_cast %28 : vector<4x8x128xf32> to vector<4x8x1x128xf32>
    %30 = vector.broadcast %27 : vector<4x8x8x1xf32> to vector<4x8x8x128xf32>
    %31 = vector.broadcast %29 : vector<4x8x1x128xf32> to vector<4x8x8x128xf32>
    %32 = arith.addf %30, %31 : vector<4x8x8x128xf32>
    %33 = math.tanh %32 : vector<4x8x8x128xf32>
    %34 = vector.extract_strided_slice %10 {offsets = [0, 8], sizes = [1, 8], strides = [1, 1]} : vector<1x32xf32> to vector<1x8xf32>
    %35 = vector.shape_cast %34 : vector<1x8xf32> to vector<1x8x1x1xf32>
    %36 = vector.broadcast %35 : vector<1x8x1x1xf32> to vector<4x8x8x128xf32>
    %37 = arith.mulf %33, %36 : vector<4x8x8x128xf32>
    %cst_12 = arith.constant dense<0.000000e+00> : vector<4x8x128xf32>
    %38 = vector.multi_reduction <add>, %37, %cst_12 [1] : vector<4x8x8x128xf32> to vector<4x8x128xf32>
    %39 = arith.addf %25, %38 : vector<4x8x128xf32>
    %40 = vector.extract_strided_slice %8 {offsets = [0, 16, 0], sizes = [4, 8, 8], strides = [1, 1, 1]} : vector<4x32x8xf32> to vector<4x8x8xf32>
    %41 = vector.shape_cast %40 : vector<4x8x8xf32> to vector<4x8x8x1xf32>
    %42 = vector.extract_strided_slice %9 {offsets = [0, 16, 0], sizes = [4, 8, 128], strides = [1, 1, 1]} : vector<4x32x128xf32> to vector<4x8x128xf32>
    %43 = vector.shape_cast %42 : vector<4x8x128xf32> to vector<4x8x1x128xf32>
    %44 = vector.broadcast %41 : vector<4x8x8x1xf32> to vector<4x8x8x128xf32>
    %45 = vector.broadcast %43 : vector<4x8x1x128xf32> to vector<4x8x8x128xf32>
    %46 = arith.addf %44, %45 : vector<4x8x8x128xf32>
    %47 = math.tanh %46 : vector<4x8x8x128xf32>
    %48 = vector.extract_strided_slice %10 {offsets = [0, 16], sizes = [1, 8], strides = [1, 1]} : vector<1x32xf32> to vector<1x8xf32>
    %49 = vector.shape_cast %48 : vector<1x8xf32> to vector<1x8x1x1xf32>
    %50 = vector.broadcast %49 : vector<1x8x1x1xf32> to vector<4x8x8x128xf32>
    %51 = arith.mulf %47, %50 : vector<4x8x8x128xf32>
    %cst_13 = arith.constant dense<0.000000e+00> : vector<4x8x128xf32>
    %52 = vector.multi_reduction <add>, %51, %cst_13 [1] : vector<4x8x8x128xf32> to vector<4x8x128xf32>
    %53 = arith.addf %39, %52 : vector<4x8x128xf32>
    %54 = vector.extract_strided_slice %8 {offsets = [0, 24, 0], sizes = [4, 8, 8], strides = [1, 1, 1]} : vector<4x32x8xf32> to vector<4x8x8xf32>
    %55 = vector.shape_cast %54 : vector<4x8x8xf32> to vector<4x8x8x1xf32>
    %56 = vector.extract_strided_slice %9 {offsets = [0, 24, 0], sizes = [4, 8, 128], strides = [1, 1, 1]} : vector<4x32x128xf32> to vector<4x8x128xf32>
    %57 = vector.shape_cast %56 : vector<4x8x128xf32> to vector<4x8x1x128xf32>
    %58 = vector.broadcast %55 : vector<4x8x8x1xf32> to vector<4x8x8x128xf32>
    %59 = vector.broadcast %57 : vector<4x8x1x128xf32> to vector<4x8x8x128xf32>
    %60 = arith.addf %58, %59 : vector<4x8x8x128xf32>
    %61 = math.tanh %60 : vector<4x8x8x128xf32>
    %62 = vector.extract_strided_slice %10 {offsets = [0, 24], sizes = [1, 8], strides = [1, 1]} : vector<1x32xf32> to vector<1x8xf32>
    %63 = vector.shape_cast %62 : vector<1x8xf32> to vector<1x8x1x1xf32>
    %64 = vector.broadcast %63 : vector<1x8x1x1xf32> to vector<4x8x8x128xf32>
    %65 = arith.mulf %61, %64 : vector<4x8x8x128xf32>
    %cst_14 = arith.constant dense<0.000000e+00> : vector<4x8x128xf32>
    %66 = vector.multi_reduction <add>, %65, %cst_14 [1] : vector<4x8x8x128xf32> to vector<4x8x128xf32>
    %67 = arith.addf %53, %66 : vector<4x8x128xf32>
    %c0_15 = arith.constant 0 : index
    %c0_16 = arith.constant 0 : index
    %68 = vector.load %arg2[%c0_15, %c0_16] : memref<4x8xi32, #tpu.memory_space<vmem>>, vector<4x8xi32>
    %69 = vector.shape_cast %68 : vector<4x8xi32> to vector<4x8x1xi32>
    %70 = tpu.iota {dimensions = array<i32: 1>} : vector<8x128xi32>
    %71 = vector.shape_cast %70 : vector<8x128xi32> to vector<1x8x128xi32>
    %72 = vector.broadcast %71 : vector<1x8x128xi32> to vector<4x8x128xi32>
    %73 = vector.broadcast %69 : vector<4x8x1xi32> to vector<4x8x128xi32>
    %74 = arith.cmpi slt, %72, %73 : vector<4x8x128xi32>
    %cst_17 = arith.constant -1.000000e+06 : f32
    %75 = vector.broadcast %cst_17 : f32 to vector<4x8x128xf32>
    %76 = arith.select %74, %67, %75 : vector<4x8x128xi1>, vector<4x8x128xf32>
    %cst_18 = arith.constant dense<0xFF800000> : vector<4x8xf32>
    %77 = vector.multi_reduction <maximumf>, %76, %cst_18 [2] : vector<4x8x128xf32> to vector<4x8xf32>
    %78 = vector.shape_cast %77 : vector<4x8xf32> to vector<4x8x1xf32>
    %79 = vector.broadcast %78 : vector<4x8x1xf32> to vector<4x8x128xf32>
    %80 = arith.subf %76, %79 : vector<4x8x128xf32>
    %81 = math.exp %80 : vector<4x8x128xf32>
    %cst_19 = arith.constant dense<0.000000e+00> : vector<4x8xf32>
    %82 = vector.multi_reduction <add>, %81, %cst_19 [2] : vector<4x8x128xf32> to vector<4x8xf32>
    %83 = vector.shape_cast %82 : vector<4x8xf32> to vector<4x8x1xf32>
    %c0_20 = arith.constant 0 : index
    %c0_21 = arith.constant 0 : index
    %c0_22 = arith.constant 0 : index
    %84 = vector.load %arg5[%c0_20, %c0_21, %c0_22] : memref<4x128x128xf32, #tpu.memory_space<vmem>>, vector<4x128x128xf32>
    "tpu.trace_start"() <{level = 10 : i32, message = "gqk,gkd->gqd"}> : () -> ()
    %cst_23 = arith.constant dense<0.000000e+00> : vector<4x8x128xf32>
    %85 = tpu.matmul %81, %84, %cst_23 {dimension_numbers = #tpu.dot_dimension_numbers<[2], [1], [1], [2], [0, 0, 0, 1, 1, 2], [0], [0]>} : vector<4x8x128xf32>, vector<4x128x128xf32>, vector<4x8x128xf32> -> vector<4x8x128xf32>
    "tpu.trace_stop"() : () -> ()
    %86 = tpu.reciprocal %83 : vector<4x8x1xf32> -> vector<4x8x1xf32>
    %87 = vector.broadcast %86 : vector<4x8x1xf32> to vector<4x8x128xf32>
    %88 = arith.mulf %85, %87 : vector<4x8x128xf32>
    %c0_24 = arith.constant 0 : index
    %c0_25 = arith.constant 0 : index
    %c0_26 = arith.constant 0 : index
    %89 = vector.load %arg9[%c0_24, %c0_25, %c0_26] : memref<4x8x128xf32, #tpu.memory_space<vmem>>, vector<4x8x128xf32>
    tpu.vector_store %arg9[%c0_24, %c0_25, %c0_26], %88 {strides = array<i32>} : memref<4x8x128xf32, #tpu.memory_space<vmem>>, vector<4x8x128xf32>,
    return
  }
  func.func @transform_0(%arg0: i32, %arg1: i32) -> (i32, i32) {
    %c0_i32 = arith.constant 0 : i32
    return %arg0, %arg1 : i32, i32
  }
  func.func @transform_1(%arg0: i32, %arg1: i32) -> (i32, i32, i32) {
    %c0_i32 = arith.constant 0 : i32
    %c0_i32_0 = arith.constant 0 : i32
    return %arg0, %arg1, %c0_i32 : i32, i32, i32
  }
  func.func @transform_2(%arg0: i32, %arg1: i32) -> (i32, i32, i32) {
    %c0_i32 = arith.constant 0 : i32
    %c0_i32_0 = arith.constant 0 : i32
    %c0_i32_1 = arith.constant 0 : i32
    return %arg0, %c0_i32, %c0_i32_0 : i32, i32, i32
  }
  func.func @transform_3(%arg0: i32, %arg1: i32) -> (i32, i32, i32) {
    %c0_i32 = arith.constant 0 : i32
    %c0_i32_0 = arith.constant 0 : i32
    %c0_i32_1 = arith.constant 0 : i32
    return %arg0, %c0_i32, %c0_i32_0 : i32, i32, i32
  }
  func.func @transform_4(%arg0: i32, %arg1: i32) -> (i32, i32) {
    %c0_i32 = arith.constant 0 : i32
    %c0_i32_0 = arith.constant 0 : i32
    %c0_i32_1 = arith.constant 0 : i32
    return %c0_i32, %c0_i32_0 : i32, i32
  }
  func.func @transform_5(%arg0: i32, %arg1: i32) -> (i32, i32) {
    %c0_i32 = arith.constant 0 : i32
    %c0_i32_0 = arith.constant 0 : i32
    %c0_i32_1 = arith.constant 0 : i32
    return %c0_i32, %c0_i32_0 : i32, i32
  }
  func.func @transform_6(%arg0: i32, %arg1: i32) -> (i32, i32) {
    %c0_i32 = arith.constant 0 : i32
    %c0_i32_0 = arith.constant 0 : i32
    %c0_i32_1 = arith.constant 0 : i32
    return %c0_i32, %c0_i32_0 : i32, i32
  }
  func.func @transform_7(%arg0: i32, %arg1: i32) -> (i32, i32, i32) {
    %c0_i32 = arith.constant 0 : i32
    %c0_i32_0 = arith.constant 0 : i32
    return %arg0, %arg1, %c0_i32 : i32, i32, i32
  }
}

</mosaic_0001>

<llo_original>
// kernel: tpu_custom_call.1
$region0: #{tpu_custom_call.1}
  #allocation0 [shape = 'u32[]', space=smem, size = 0x4, offset = 0x4, fixed_abs, tag = 'smem constant byte address 0x4 - core index']
  #allocation1 [shape = 'u32[72,128]{1,0:T(1,128)}', space=vmem, size = 0x9000, scoped, tag = 'internal scratch']
  #allocation2 [shape = 'f32[4,32,128]{2,1,0:T(8,128)}', space=vmem, size = 0x10000, scoped, tag = 'scratch operand']
  %s0 = inlined_call_operand.vmem [shape: s32[4,8], index: 0, kind: input, shape index: {}]
  %s1 = inlined_call_operand.vmem [shape: f32[4,8,20], index: 1, kind: input, shape index: {}]
  %s2 = inlined_call_operand.vmem [shape: f32[4,128,16], index: 2, kind: input, shape index: {}]
  %s3 = inlined_call_operand.vmem [shape: f32[4,128,128], index: 3, kind: input, shape index: {}]
  %s4 = inlined_call_operand.vmem [shape: f32[20,32], index: 4, kind: input, shape index: {}]
  %s5 = inlined_call_operand.hbm [shape: f32[16,32], index: 5, kind: input, shape index: {}]
  %s6 = inlined_call_operand.vmem [shape: f32[1,32], index: 6, kind: input, shape index: {}]
  %s7 = inlined_call_operand.hbm [shape: f32[4,8,128], index: 7, kind: output, shape index: {}]
  %s8 = sld [smem:[#allocation0]]
  $region46: #{tpu_custom_call.1} parent=0
    _
  %s10 = ssub.s32 1, %s8
  %s11 = scalar_select 0, %s10, %s8
  $region1: #{tpu_custom_call.1} parent=0
    #allocation3 [shape = 'u8[8192]{0}', space=vmem, size = 0x2000, scoped, tag = 'input window, operand 5, single buffered']
    #allocation4 [shape = 's32[1]{0}', space=sflag, size = 0x4, scoped, tag = 'scoped memory for tpu_custom_call.1']
    #allocation5 [shape = 's32[1]{0}', space=sflag, size = 0x4, scoped, tag = 'scoped memory for tpu_custom_call.1']
    #allocation6 [shape = 'u8[16384]{0}', space=vmem, size = 0x4000, scoped, tag = 'output window, operand 0, single buffered']
    %12 = vsyncpa [#allocation4], 0
    %13 = vsyncpa [#allocation5], 0
    // Predicated region
    $region2: #{tpu_custom_call.1} parent=1 // pred_check
      _
    $region3: #{tpu_custom_call.1} parent=1 // pred_check_branch
      %15 = sbr.rel (0) target = $region5
    $region4: #{tpu_custom_call.1} parent=1 // pred_region
      _
    $region5: #{tpu_custom_call.1} parent=1 // pred_fallthru
      _
    // Predicated region
    $region6: #{tpu_custom_call.1} parent=1 // pred_check
      _
    $region7: #{tpu_custom_call.1} parent=1 // pred_check_branch
      %17 = sbr.rel (0) target = $region9
    $region8: #{tpu_custom_call.1} parent=1 // pred_region
      _
    $region9: #{tpu_custom_call.1} parent=1 // pred_fallthru
      _
    // Predicated region
    $region10: #{tpu_custom_call.1} parent=1 // pred_check
      _
    $region11: #{tpu_custom_call.1} parent=1 // pred_check_branch
      %19 = sbr.rel (0) target = $region13
    $region12: #{tpu_custom_call.1} parent=1 // pred_region
      _
    $region13: #{tpu_custom_call.1} parent=1 // pred_fallthru
      _
    // Predicated region
    $region14: #{tpu_custom_call.1} parent=1 // pred_check
      _
    $region15: #{tpu_custom_call.1} parent=1 // pred_check_branch
      %21 = sbr.rel (0) target = $region17
    $region16: #{tpu_custom_call.1} parent=1 // pred_region
      _
    $region17: #{tpu_custom_call.1} parent=1 // pred_fallthru
      _
    // Predicated region
    $region18: #{tpu_custom_call.1} parent=1 // pred_check
      _
    $region19: #{tpu_custom_call.1} parent=1 // pred_check_branch
      %23 = sbr.rel (0) target = $region21
    $region20: #{tpu_custom_call.1} parent=1 // pred_region
      _
    $region21: #{tpu_custom_call.1} parent=1 // pred_fallthru
      _
    // Predicated region
    $region22: #{tpu_custom_call.1} parent=1 // pred_check
      _
    $region23: #{tpu_custom_call.1} parent=1 // pred_check_branch
      %25 = sbr.rel (0) target = $region25
    $region24: #{tpu_custom_call.1} parent=1 // pred_region
      %27 = vsyncadd [#allocation4], 0
      %s28 = sshll.u32 %s5, 4
      %s29 = int_to_ptr.hbm [resolvable:$true] %s28
      %s30 = sshll.u32 [#allocation3], 4
      %s31 = int_to_ptr.vmem [resolvable:$true] %s30
      %36 = dma.hbm_to_vmem [thread:$0]  %s29, 256, %s31, [#allocation4], 128, 128, 8
    $region25: #{tpu_custom_call.1} parent=1 // pred_fallthru
      _
    // Predicated region
    $region26: #{tpu_custom_call.1} parent=1 // pred_check
      _
    $region27: #{tpu_custom_call.1} parent=1 // pred_check_branch
      %38 = sbr.rel (0) target = $region29
    $region28: #{tpu_custom_call.1} parent=1 // pred_region
      _
    $region29: #{tpu_custom_call.1} parent=1 // pred_fallthru
      _
    // Predicated region
    $region30: #{tpu_custom_call.1} parent=1 // pred_check
      _
    $region31: #{tpu_custom_call.1} parent=1 // pred_check_branch
      %40 = sbr.rel (0) target = $region33
    $region32: #{tpu_custom_call.1} parent=1 // pred_region
      %42 = dma.done [#allocation4], 256
    $region33: #{tpu_custom_call.1} parent=1 // pred_fallthru
      _
    %p43 = scmp.eq.s32.totalorder 0, 0
    // Predicated region
    $region34: #{tpu_custom_call.1} parent=1 // pred_check
      %p44 = pneg %p43
    $region35: #{tpu_custom_call.1} parent=1 // pred_check_branch
      %46 = sbr.rel (%p44) target = $region37
    $region36: #{tpu_custom_call.1} parent=1 // pred_region
      %v47 = vld [vmem:[%s2] sm:$0xff]
      %v48 = vld [vmem:[%s2 + $0x8] sm:$0xff]
      %v49 = vld [vmem:[%s2 + $0x10] sm:$0xff]
      %v50 = vld [vmem:[%s2 + $0x18] sm:$0xff]
      %v51 = vld [vmem:[%s2 + $0x20] sm:$0xff]
      %v52 = vld [vmem:[%s2 + $0x28] sm:$0xff]
      %v53 = vld [vmem:[%s2 + $0x30] sm:$0xff]
      %v54 = vld [vmem:[%s2 + $0x38] sm:$0xff]
      %v55 = vld [vmem:[%s2 + $0x40] sm:$0xff]
      %v56 = vld [vmem:[%s2 + $0x48] sm:$0xff]
      %v57 = vld [vmem:[%s2 + $0x50] sm:$0xff]
      %v58 = vld [vmem:[%s2 + $0x58] sm:$0xff]
      %v59 = vld [vmem:[%s2 + $0x60] sm:$0xff]
      %v60 = vld [vmem:[%s2 + $0x68] sm:$0xff]
      %v61 = vld [vmem:[%s2 + $0x70] sm:$0xff]
      %v62 = vld [vmem:[%s2 + $0x78] sm:$0xff]
      %v63 = vld [vmem:[%s2 + $0x80] sm:$0xff]
      %v64 = vld [vmem:[%s2 + $0x88] sm:$0xff]
      %v65 = vld [vmem:[%s2 + $0x90] sm:$0xff]
      %v66 = vld [vmem:[%s2 + $0x98] sm:$0xff]
      %v67 = vld [vmem:[%s2 + $0xa0] sm:$0xff]
      %v68 = vld [vmem:[%s2 + $0xa8] sm:$0xff]
      %v69 = vld [vmem:[%s2 + $0xb0] sm:$0xff]
      %v70 = vld [vmem:[%s2 + $0xb8] sm:$0xff]
      %v71 = vld [vmem:[%s2 + $0xc0] sm:$0xff]
      %v72 = vld [vmem:[%s2 + $0xc8] sm:$0xff]
      %v73 = vld [vmem:[%s2 + $0xd0] sm:$0xff]
      %v74 = vld [vmem:[%s2 + $0xd8] sm:$0xff]
      %v75 = vld [vmem:[%s2 + $0xe0] sm:$0xff]
      %v76 = vld [vmem:[%s2 + $0xe8] sm:$0xff]
      %v77 = vld [vmem:[%s2 + $0xf0] sm:$0xff]
      %v78 = vld [vmem:[%s2 + $0xf8] sm:$0xff]
      %v79 = vld [vmem:[%s2 + $0x100] sm:$0xff]
      %v80 = vld [vmem:[%s2 + $0x108] sm:$0xff]
      %v81 = vld [vmem:[%s2 + $0x110] sm:$0xff]
      %v82 = vld [vmem:[%s2 + $0x118] sm:$0xff]
      %v83 = vld [vmem:[%s2 + $0x120] sm:$0xff]
      %v84 = vld [vmem:[%s2 + $0x128] sm:$0xff]
      %v85 = vld [vmem:[%s2 + $0x130] sm:$0xff]
      %v86 = vld [vmem:[%s2 + $0x138] sm:$0xff]
      %v87 = vld [vmem:[%s2 + $0x140] sm:$0xff]
      %v88 = vld [vmem:[%s2 + $0x148] sm:$0xff]
      %v89 = vld [vmem:[%s2 + $0x150] sm:$0xff]
      %v90 = vld [vmem:[%s2 + $0x158] sm:$0xff]
      %v91 = vld [vmem:[%s2 + $0x160] sm:$0xff]
      %v92 = vld [vmem:[%s2 + $0x168] sm:$0xff]
      %v93 = vld [vmem:[%s2 + $0x170] sm:$0xff]
      %v94 = vld [vmem:[%s2 + $0x178] sm:$0xff]
      %v95 = vld [vmem:[%s2 + $0x180] sm:$0xff]
      %v96 = vld [vmem:[%s2 + $0x188] sm:$0xff]
      %v97 = vld [vmem:[%s2 + $0x190] sm:$0xff]
      %v98 = vld [vmem:[%s2 + $0x198] sm:$0xff]
      %v99 = vld [vmem:[%s2 + $0x1a0] sm:$0xff]
      %v100 = vld [vmem:[%s2 + $0x1a8] sm:$0xff]
      %v101 = vld [vmem:[%s2 + $0x1b0] sm:$0xff]
      %v102 = vld [vmem:[%s2 + $0x1b8] sm:$0xff]
      %v103 = vld [vmem:[%s2 + $0x1c0] sm:$0xff]
      %v104 = vld [vmem:[%s2 + $0x1c8] sm:$0xff]
      %v105 = vld [vmem:[%s2 + $0x1d0] sm:$0xff]
      %v106 = vld [vmem:[%s2 + $0x1d8] sm:$0xff]
      %v107 = vld [vmem:[%s2 + $0x1e0] sm:$0xff]
      %v108 = vld [vmem:[%s2 + $0x1e8] sm:$0xff]
      %v109 = vld [vmem:[%s2 + $0x1f0] sm:$0xff]
      %v110 = vld [vmem:[%s2 + $0x1f8] sm:$0xff]
      %v111 = vld [vmem:[#allocation3] sm:$0xff]
      %v112 = vld [vmem:[#allocation3 + $0x8] sm:$0xff]
      %vm113 = vcmask 130048
      %v115 = vsel %vm113, %v47, 0
      %v118 = vsel %vm113, %v48, 0
      %v121 = vsel %vm113, %v49, 0
      %v124 = vsel %vm113, %v50, 0
      %v127 = vsel %vm113, %v51, 0
      %v130 = vsel %vm113, %v52, 0
      %v133 = vsel %vm113, %v53, 0
      %v136 = vsel %vm113, %v54, 0
      %v139 = vsel %vm113, %v55, 0
      %v142 = vsel %vm113, %v56, 0
      %v145 = vsel %vm113, %v57, 0
      %v148 = vsel %vm113, %v58, 0
      %v151 = vsel %vm113, %v59, 0
      %v154 = vsel %vm113, %v60, 0
      %v157 = vsel %vm113, %v61, 0
      %v160 = vsel %vm113, %v62, 0
      %v163 = vsel %vm113, %v63, 0
      %v166 = vsel %vm113, %v64, 0
      %v169 = vsel %vm113, %v65, 0
      %v172 = vsel %vm113, %v66, 0
      %v175 = vsel %vm113, %v67, 0
      %v178 = vsel %vm113, %v68, 0
      %v181 = vsel %vm113, %v69, 0
      %v184 = vsel %vm113, %v70, 0
      %v187 = vsel %vm113, %v71, 0
      %v190 = vsel %vm113, %v72, 0
      %v193 = vsel %vm113, %v73, 0
      %v196 = vsel %vm113, %v74, 0
      %v199 = vsel %vm113, %v75, 0
      %v202 = vsel %vm113, %v76, 0
      %v205 = vsel %vm113, %v77, 0
      %v208 = vsel %vm113, %v78, 0
      %v211 = vsel %vm113, %v79, 0
      %v214 = vsel %vm113, %v80, 0
      %v217 = vsel %vm113, %v81, 0
      %v220 = vsel %vm113, %v82, 0
      %v223 = vsel %vm113, %v83, 0
      %v226 = vsel %vm113, %v84, 0
      %v229 = vsel %vm113, %v85, 0
      %v232 = vsel %vm113, %v86, 0
      %v235 = vsel %vm113, %v87, 0
      %v238 = vsel %vm113, %v88, 0
      %v241 = vsel %vm113, %v89, 0
      %v244 = vsel %vm113, %v90, 0
      %v247 = vsel %vm113, %v91, 0
      %v250 = vsel %vm113, %v92, 0
      %v253 = vsel %vm113, %v93, 0
      %v256 = vsel %vm113, %v94, 0
      %v259 = vsel %vm113, %v95, 0
      %v262 = vsel %vm113, %v96, 0
      %v265 = vsel %vm113, %v97, 0
      %v268 = vsel %vm113, %v98, 0
      %v271 = vsel %vm113, %v99, 0
      %v274 = vsel %vm113, %v100, 0
      %v277 = vsel %vm113, %v101, 0
      %v280 = vsel %vm113, %v102, 0
      %v283 = vsel %vm113, %v103, 0
      %v286 = vsel %vm113, %v104, 0
      %v289 = vsel %vm113, %v105, 0
      %v292 = vsel %vm113, %v106, 0
      %v295 = vsel %vm113, %v107, 0
      %v298 = vsel %vm113, %v108, 0
      %v301 = vsel %vm113, %v109, 0
      %v304 = vsel %vm113, %v110, 0
      %306 = vmatpush.msra.mxu0 0.0
      %307 = vmatpush.msra.mxu0 0.0
      %308 = vmatpush.msra.mxu0 0.0
      %309 = vmatpush.msra.mxu0 0.0
      %310 = vmatpush.msra.mxu0 0.0
      %311 = vmatpush.msra.mxu0 0.0
      %312 = vmatpush.msra.mxu0 0.0
      %313 = vmatpush.msra.mxu0 0.0
      %314 = vmatpush.msra.mxu0 0.0
      %315 = vmatpush.msra.mxu0 0.0
      %316 = vmatpush.msra.mxu0 0.0
      %317 = vmatpush.msra.mxu0 0.0
      %318 = vmatpush.msra.mxu0 0.0
      %319 = vmatpush.msra.mxu0 0.0
      %320 = vmatpush.msra.mxu0 %v112
      %321 = vmatpush.msra.mxu0 %v111
      %322 = vmatmul.f32.gmra.mxu0 %v115
      %v323 = vpop.f32.mrf.mxu0
      %v324 = vadd.f32 0.0, %v323
      %325 = vmatmul.f32.gmra.mxu0 %v118
      %v326 = vpop.f32.mrf.mxu0
      %v327 = vadd.f32 0.0, %v326
      %328 = vmatmul.f32.gmra.mxu0 %v121
      %v329 = vpop.f32.mrf.mxu0
      %v330 = vadd.f32 0.0, %v329
      %331 = vmatmul.f32.gmra.mxu0 %v124
      %v332 = vpop.f32.mrf.mxu0
      %v333 = vadd.f32 0.0, %v332
      %334 = vmatmul.f32.gmra.mxu0 %v127
      %v335 = vpop.f32.mrf.mxu0
      %v336 = vadd.f32 0.0, %v335
      %337 = vmatmul.f32.gmra.mxu0 %v130
      %v338 = vpop.f32.mrf.mxu0
      %v339 = vadd.f32 0.0, %v338
      %340 = vmatmul.f32.gmra.mxu0 %v133
      %v341 = vpop.f32.mrf.mxu0
      %v342 = vadd.f32 0.0, %v341
      %343 = vmatmul.f32.gmra.mxu0 %v136
      %v344 = vpop.f32.mrf.mxu0
      %v345 = vadd.f32 0.0, %v344
      %346 = vmatmul.f32.gmra.mxu0 %v139
      %v347 = vpop.f32.mrf.mxu0
      %v348 = vadd.f32 0.0, %v347
      %349 = vmatmul.f32.gmra.mxu0 %v142
      %v350 = vpop.f32.mrf.mxu0
      %v351 = vadd.f32 0.0, %v350
      %352 = vmatmul.f32.gmra.mxu0 %v145
      %v353 = vpop.f32.mrf.mxu0
      %v354 = vadd.f32 0.0, %v353
      %355 = vmatmul.f32.gmra.mxu0 %v148
      %v356 = vpop.f32.mrf.mxu0
      %v357 = vadd.f32 0.0, %v356
      %358 = vmatmul.f32.gmra.mxu0 %v151
      %v359 = vpop.f32.mrf.mxu0
      %v360 = vadd.f32 0.0, %v359
      %361 = vmatmul.f32.gmra.mxu0 %v154
      %v362 = vpop.f32.mrf.mxu0
      %v363 = vadd.f32 0.0, %v362
      %364 = vmatmul.f32.gmra.mxu0 %v157
      %v365 = vpop.f32.mrf.mxu0
      %v366 = vadd.f32 0.0, %v365
      %367 = vmatmul.f32.gmra.mxu0 %v160
      %v368 = vpop.f32.mrf.mxu0
      %v369 = vadd.f32 0.0, %v368
      %370 = vmatmul.f32.gmra.mxu0 %v163
      %v371 = vpop.f32.mrf.mxu0
      %v372 = vadd.f32 0.0, %v371
      %373 = vmatmul.f32.gmra.mxu0 %v166
      %v374 = vpop.f32.mrf.mxu0
      %v375 = vadd.f32 0.0, %v374
      %376 = vmatmul.f32.gmra.mxu0 %v169
      %v377 = vpop.f32.mrf.mxu0
      %v378 = vadd.f32 0.0, %v377
      %379 = vmatmul.f32.gmra.mxu0 %v172
      %v380 = vpop.f32.mrf.mxu0
      %v381 = vadd.f32 0.0, %v380
      %382 = vmatmul.f32.gmra.mxu0 %v175
      %v383 = vpop.f32.mrf.mxu0
      %v384 = vadd.f32 0.0, %v383
      %385 = vmatmul.f32.gmra.mxu0 %v178
      %v386 = vpop.f32.mrf.mxu0
      %v387 = vadd.f32 0.0, %v386
      %388 = vmatmul.f32.gmra.mxu0 %v181
      %v389 = vpop.f32.mrf.mxu0
      %v390 = vadd.f32 0.0, %v389
      %391 = vmatmul.f32.gmra.mxu0 %v184
      %v392 = vpop.f32.mrf.mxu0
      %v393 = vadd.f32 0.0, %v392
      %394 = vmatmul.f32.gmra.mxu0 %v187
      %v395 = vpop.f32.mrf.mxu0
      %v396 = vadd.f32 0.0, %v395
      %397 = vmatmul.f32.gmra.mxu0 %v190
      %v398 = vpop.f32.mrf.mxu0
      %v399 = vadd.f32 0.0, %v398
      %400 = vmatmul.f32.gmra.mxu0 %v193
      %v401 = vpop.f32.mrf.mxu0
      %v402 = vadd.f32 0.0, %v401
      %403 = vmatmul.f32.gmra.mxu0 %v196
      %v404 = vpop.f32.mrf.mxu0
      %v405 = vadd.f32 0.0, %v404
      %406 = vmatmul.f32.gmra.mxu0 %v199
      %v407 = vpop.f32.mrf.mxu0
      %v408 = vadd.f32 0.0, %v407
      %409 = vmatmul.f32.gmra.mxu0 %v202
      %v410 = vpop.f32.mrf.mxu0
      %v411 = vadd.f32 0.0, %v410
      %412 = vmatmul.f32.gmra.mxu0 %v205
      %v413 = vpop.f32.mrf.mxu0
      %v414 = vadd.f32 0.0, %v413
      %415 = vmatmul.f32.gmra.mxu0 %v208
      %v416 = vpop.f32.mrf.mxu0
      %v417 = vadd.f32 0.0, %v416
      %418 = vmatmul.f32.gmra.mxu0 %v211
      %v419 = vpop.f32.mrf.mxu0
      %v420 = vadd.f32 0.0, %v419
      %421 = vmatmul.f32.gmra.mxu0 %v214
      %v422 = vpop.f32.mrf.mxu0
      %v423 = vadd.f32 0.0, %v422
      %424 = vmatmul.f32.gmra.mxu0 %v217
      %v425 = vpop.f32.mrf.mxu0
      %v426 = vadd.f32 0.0, %v425
      %427 = vmatmul.f32.gmra.mxu0 %v220
      %v428 = vpop.f32.mrf.mxu0
      %v429 = vadd.f32 0.0, %v428
      %430 = vmatmul.f32.gmra.mxu0 %v223
      %v431 = vpop.f32.mrf.mxu0
      %v432 = vadd.f32 0.0, %v431
      %433 = vmatmul.f32.gmra.mxu0 %v226
      %v434 = vpop.f32.mrf.mxu0
      %v435 = vadd.f32 0.0, %v434
      %436 = vmatmul.f32.gmra.mxu0 %v229
      %v437 = vpop.f32.mrf.mxu0
      %v438 = vadd.f32 0.0, %v437
      %439 = vmatmul.f32.gmra.mxu0 %v232
      %v440 = vpop.f32.mrf.mxu0
      %v441 = vadd.f32 0.0, %v440
      %442 = vmatmul.f32.gmra.mxu0 %v235
      %v443 = vpop.f32.mrf.mxu0
      %v444 = vadd.f32 0.0, %v443
      %445 = vmatmul.f32.gmra.mxu0 %v238
      %v446 = vpop.f32.mrf.mxu0
      %v447 = vadd.f32 0.0, %v446
      %448 = vmatmul.f32.gmra.mxu0 %v241
      %v449 = vpop.f32.mrf.mxu0
      %v450 = vadd.f32 0.0, %v449
      %451 = vmatmul.f32.gmra.mxu0 %v244
      %v452 = vpop.f32.mrf.mxu0
      %v453 = vadd.f32 0.0, %v452
      %454 = vmatmul.f32.gmra.mxu0 %v247
      %v455 = vpop.f32.mrf.mxu0
      %v456 = vadd.f32 0.0, %v455
      %457 = vmatmul.f32.gmra.mxu0 %v250
      %v458 = vpop.f32.mrf.mxu0
      %v459 = vadd.f32 0.0, %v458
      %460 = vmatmul.f32.gmra.mxu0 %v253
      %v461 = vpop.f32.mrf.mxu0
      %v462 = vadd.f32 0.0, %v461
      %463 = vmatmul.f32.gmra.mxu0 %v256
      %v464 = vpop.f32.mrf.mxu0
      %v465 = vadd.f32 0.0, %v464
      %466 = vmatmul.f32.gmra.mxu0 %v259
      %v467 = vpop.f32.mrf.mxu0
      %v468 = vadd.f32 0.0, %v467
      %469 = vmatmul.f32.gmra.mxu0 %v262
      %v470 = vpop.f32.mrf.mxu0
      %v471 = vadd.f32 0.0, %v470
      %472 = vmatmul.f32.gmra.mxu0 %v265
      %v473 = vpop.f32.mrf.mxu0
      %v474 = vadd.f32 0.0, %v473
      %475 = vmatmul.f32.gmra.mxu0 %v268
      %v476 = vpop.f32.mrf.mxu0
      %v477 = vadd.f32 0.0, %v476
      %478 = vmatmul.f32.gmra.mxu0 %v271
      %v479 = vpop.f32.mrf.mxu0
      %v480 = vadd.f32 0.0, %v479
      %481 = vmatmul.f32.gmra.mxu0 %v274
      %v482 = vpop.f32.mrf.mxu0
      %v483 = vadd.f32 0.0, %v482
      %484 = vmatmul.f32.gmra.mxu0 %v277
      %v485 = vpop.f32.mrf.mxu0
      %v486 = vadd.f32 0.0, %v485
      %487 = vmatmul.f32.gmra.mxu0 %v280
      %v488 = vpop.f32.mrf.mxu0
      %v489 = vadd.f32 0.0, %v488
      %490 = vmatmul.f32.gmra.mxu0 %v283
      %v491 = vpop.f32.mrf.mxu0
      %v492 = vadd.f32 0.0, %v491
      %493 = vmatmul.f32.gmra.mxu0 %v286
      %v494 = vpop.f32.mrf.mxu0
      %v495 = vadd.f32 0.0, %v494
      %496 = vmatmul.f32.gmra.mxu0 %v289
      %v497 = vpop.f32.mrf.mxu0
      %v498 = vadd.f32 0.0, %v497
      %499 = vmatmul.f32.gmra.mxu0 %v292
      %v500 = vpop.f32.mrf.mxu0
      %v501 = vadd.f32 0.0, %v500
      %502 = vmatmul.f32.gmra.mxu0 %v295
      %v503 = vpop.f32.mrf.mxu0
      %v504 = vadd.f32 0.0, %v503
      %505 = vmatmul.f32.gmra.mxu0 %v298
      %v506 = vpop.f32.mrf.mxu0
      %v507 = vadd.f32 0.0, %v506
      %508 = vmatmul.f32.gmra.mxu0 %v301
      %v509 = vpop.f32.mrf.mxu0
      %v510 = vadd.f32 0.0, %v509
      %511 = vmatmul.f32.gmra.mxu0 %v304
      %v512 = vpop.f32.mrf.mxu0
      %v513 = vadd.f32 0.0, %v512
      %514 = vdwg.mxu0
      %515 = vxpose.xlu0.b32.start [1/16] %v324, 128
      %516 = vxpose.xlu0.b32.cont [2/16] %v327, 128
      %517 = vxpose.xlu0.b32.cont [3/16] %v330, 128
      %518 = vxpose.xlu0.b32.cont [4/16] %v333, 128
      %519 = vxpose.xlu0.b32.cont [5/16] %v336, 128
      %520 = vxpose.xlu0.b32.cont [6/16] %v339, 128
      %521 = vxpose.xlu0.b32.cont [7/16] %v342, 128
      %522 = vxpose.xlu0.b32.cont [8/16] %v345, 128
      %523 = vxpose.xlu0.b32.cont [9/16] %v348, 128
      %524 = vxpose.xlu0.b32.cont [10/16] %v351, 128
      %525 = vxpose.xlu0.b32.cont [11/16] %v354, 128
      %526 = vxpose.xlu0.b32.cont [12/16] %v357, 128
      %527 = vxpose.xlu0.b32.cont [13/16] %v360, 128
      %528 = vxpose.xlu0.b32.cont [14/16] %v363, 128
      %529 = vxpose.xlu0.b32.cont [15/16] %v366, 128
      %530 = vxpose.xlu0.b32.end [16/16] %v369, 128
      %v531 = vpop.trf.xlu0
      %v532 = vpop.trf.xlu0
      %v533 = vpop.trf.xlu0
      %v534 = vpop.trf.xlu0
      %v535 = vpop.trf.xlu0
      %v536 = vpop.trf.xlu0
      %v537 = vpop.trf.xlu0
      %v538 = vpop.trf.xlu0
      %v539 = vpop.trf.xlu0
      %v540 = vpop.trf.xlu0
      %v541 = vpop.trf.xlu0
      %v542 = vpop.trf.xlu0
      %v543 = vpop.trf.xlu0
      %v544 = vpop.trf.xlu0
      %v545 = vpop.trf.xlu0
      %v546 = vpop.trf.xlu0
      %547 = vxpose.xlu0.b32.start [1/16] %v372, 128
      %548 = vxpose.xlu0.b32.cont [2/16] %v375, 128
      %549 = vxpose.xlu0.b32.cont [3/16] %v378, 128
      %550 = vxpose.xlu0.b32.cont [4/16] %v381, 128
      %551 = vxpose.xlu0.b32.cont [5/16] %v384, 128
      %552 = vxpose.xlu0.b32.cont [6/16] %v387, 128
      %553 = vxpose.xlu0.b32.cont [7/16] %v390, 128
      %554 = vxpose.xlu0.b32.cont [8/16] %v393, 128
      %555 = vxpose.xlu0.b32.cont [9/16] %v396, 128
      %556 = vxpose.xlu0.b32.cont [10/16] %v399, 128
      %557 = vxpose.xlu0.b32.cont [11/16] %v402, 128
      %558 = vxpose.xlu0.b32.cont [12/16] %v405, 128
      %559 = vxpose.xlu0.b32.cont [13/16] %v408, 128
      %560 = vxpose.xlu0.b32.cont [14/16] %v411, 128
      %561 = vxpose.xlu0.b32.cont [15/16] %v414, 128
      %562 = vxpose.xlu0.b32.end [16/16] %v417, 128
      %v563 = vpop.trf.xlu0
      %v564 = vpop.trf.xlu0
      %v565 = vpop.trf.xlu0
      %v566 = vpop.trf.xlu0
      %v567 = vpop.trf.xlu0
      %v568 = vpop.trf.xlu0
      %v569 = vpop.trf.xlu0
      %v570 = vpop.trf.xlu0
      %v571 = vpop.trf.xlu0
      %v572 = vpop.trf.xlu0
      %v573 = vpop.trf.xlu0
      %v574 = vpop.trf.xlu0
      %v575 = vpop.trf.xlu0
      %v576 = vpop.trf.xlu0
      %v577 = vpop.trf.xlu0
      %v578 = vpop.trf.xlu0
      %579 = vxpose.xlu0.b32.start [1/16] %v420, 128
      %580 = vxpose.xlu0.b32.cont [2/16] %v423, 128
      %581 = vxpose.xlu0.b32.cont [3/16] %v426, 128
      %582 = vxpose.xlu0.b32.cont [4/16] %v429, 128
      %583 = vxpose.xlu0.b32.cont [5/16] %v432, 128
      %584 = vxpose.xlu0.b32.cont [6/16] %v435, 128
      %585 = vxpose.xlu0.b32.cont [7/16] %v438, 128
      %586 = vxpose.xlu0.b32.cont [8/16] %v441, 128
      %587 = vxpose.xlu0.b32.cont [9/16] %v444, 128
      %588 = vxpose.xlu0.b32.cont [10/16] %v447, 128
      %589 = vxpose.xlu0.b32.cont [11/16] %v450, 128
      %590 = vxpose.xlu0.b32.cont [12/16] %v453, 128
      %591 = vxpose.xlu0.b32.cont [13/16] %v456, 128
      %592 = vxpose.xlu0.b32.cont [14/16] %v459, 128
      %593 = vxpose.xlu0.b32.cont [15/16] %v462, 128
      %594 = vxpose.xlu0.b32.end [16/16] %v465, 128
      %v595 = vpop.trf.xlu0
      %v596 = vpop.trf.xlu0
      %v597 = vpop.trf.xlu0
      %v598 = vpop.trf.xlu0
      %v599 = vpop.trf.xlu0
      %v600 = vpop.trf.xlu0
      %v601 = vpop.trf.xlu0
      %v602 = vpop.trf.xlu0
      %v603 = vpop.trf.xlu0
      %v604 = vpop.trf.xlu0
      %v605 = vpop.trf.xlu0
      %v606 = vpop.trf.xlu0
      %v607 = vpop.trf.xlu0
      %v608 = vpop.trf.xlu0
      %v609 = vpop.trf.xlu0
      %v610 = vpop.trf.xlu0
      %611 = vxpose.xlu0.b32.start [1/16] %v468, 128
      %612 = vxpose.xlu0.b32.cont [2/16] %v471, 128
      %613 = vxpose.xlu0.b32.cont [3/16] %v474, 128
      %614 = vxpose.xlu0.b32.cont [4/16] %v477, 128
      %615 = vxpose.xlu0.b32.cont [5/16] %v480, 128
      %616 = vxpose.xlu0.b32.cont [6/16] %v483, 128
      %617 = vxpose.xlu0.b32.cont [7/16] %v486, 128
      %618 = vxpose.xlu0.b32.cont [8/16] %v489, 128
      %619 = vxpose.xlu0.b32.cont [9/16] %v492, 128
      %620 = vxpose.xlu0.b32.cont [10/16] %v495, 128
      %621 = vxpose.xlu0.b32.cont [11/16] %v498, 128
      %622 = vxpose.xlu0.b32.cont [12/16] %v501, 128
      %623 = vxpose.xlu0.b32.cont [13/16] %v504, 128
      %624 = vxpose.xlu0.b32.cont [14/16] %v507, 128
      %625 = vxpose.xlu0.b32.cont [15/16] %v510, 128
      %626 = vxpose.xlu0.b32.end [16/16] %v513, 128
      %v627 = vpop.trf.xlu0
      %v628 = vpop.trf.xlu0
      %v629 = vpop.trf.xlu0
      %v630 = vpop.trf.xlu0
      %v631 = vpop.trf.xlu0
      %v632 = vpop.trf.xlu0
      %v633 = vpop.trf.xlu0
      %v634 = vpop.trf.xlu0
      %v635 = vpop.trf.xlu0
      %v636 = vpop.trf.xlu0
      %v637 = vpop.trf.xlu0
      %v638 = vpop.trf.xlu0
      %v639 = vpop.trf.xlu0
      %v640 = vpop.trf.xlu0
      %v641 = vpop.trf.xlu0
      %v642 = vpop.trf.xlu0
      %643 = vst [vmem:[#allocation2] sm:$0xff] %v531
      %644 = vst [vmem:[#allocation2 + $0x8] sm:$0xff] %v532
      %645 = vst [vmem:[#allocation2 + $0x10] sm:$0xff] %v533
      %646 = vst [vmem:[#allocation2 + $0x18] sm:$0xff] %v534
      %647 = vst [vmem:[#allocation2 + $0x20] sm:$0xff] %v563
      %648 = vst [vmem:[#allocation2 + $0x28] sm:$0xff] %v564
      %649 = vst [vmem:[#allocation2 + $0x30] sm:$0xff] %v565
      %650 = vst [vmem:[#allocation2 + $0x38] sm:$0xff] %v566
      %651 = vst [vmem:[#allocation2 + $0x40] sm:$0xff] %v595
      %652 = vst [vmem:[#allocation2 + $0x48] sm:$0xff] %v596
      %653 = vst [vmem:[#allocation2 + $0x50] sm:$0xff] %v597
      %654 = vst [vmem:[#allocation2 + $0x58] sm:$0xff] %v598
      %655 = vst [vmem:[#allocation2 + $0x60] sm:$0xff] %v627
      %656 = vst [vmem:[#allocation2 + $0x68] sm:$0xff] %v628
      %657 = vst [vmem:[#allocation2 + $0x70] sm:$0xff] %v629
      %658 = vst [vmem:[#allocation2 + $0x78] sm:$0xff] %v630
    $region37: #{tpu_custom_call.1} parent=1 // pred_fallthru
      _
    %v659 = vld [vmem:[%s1] sm:$0xff]
    %v660 = vld [vmem:[%s1 + $0x8] sm:$0xff]
    %v661 = vld [vmem:[%s1 + $0x10] sm:$0xff]
    %v662 = vld [vmem:[%s1 + $0x18] sm:$0xff]
    %v663 = vld [vmem:[%s4] sm:$0xff]
    %v664 = vld [vmem:[%s4 + $0x8] sm:$0xff]
    %v665 = vld [vmem:[%s4 + $0x10] sm:$0xf]
    %vm666 = vcmask 162816
    %v668 = vsel %vm666, %v659, 0
    %v671 = vsel %vm666, %v660, 0
    %v674 = vsel %vm666, %v661, 0
    %v677 = vsel %vm666, %v662, 0
    %vm679 = vcmask 1043456
    %v681 = vsel %vm679, %v665, 0
    %683 = vmatpush.msra.mxu0 0.0
    %684 = vmatpush.msra.mxu0 0.0
    %685 = vmatpush.msra.mxu0 0.0
    %686 = vmatpush.msra.mxu0 0.0
    %687 = vmatpush.msra.mxu0 0.0
    %688 = vmatpush.msra.mxu0 0.0
    %689 = vmatpush.msra.mxu0 0.0
    %690 = vmatpush.msra.mxu0 0.0
    %691 = vmatpush.msra.mxu0 0.0
    %692 = vmatpush.msra.mxu0 0.0
    %693 = vmatpush.msra.mxu0 0.0
    %694 = vmatpush.msra.mxu0 0.0
    %695 = vmatpush.msra.mxu0 0.0
    %696 = vmatpush.msra.mxu0 %v681
    %697 = vmatpush.msra.mxu0 %v664
    %698 = vmatpush.msra.mxu0 %v663
    %699 = vmatmul.f32.gmra.mxu0 %v668
    %v700 = vpop.f32.mrf.mxu0
    %v701 = vadd.f32 0.0, %v700
    %702 = vmatmul.f32.gmra.mxu0 %v671
    %v703 = vpop.f32.mrf.mxu0
    %v704 = vadd.f32 0.0, %v703
    %705 = vmatmul.f32.gmra.mxu0 %v674
    %v706 = vpop.f32.mrf.mxu0
    %v707 = vadd.f32 0.0, %v706
    %708 = vmatmul.f32.gmra.mxu0 %v677
    %v709 = vpop.f32.mrf.mxu0
    %v710 = vadd.f32 0.0, %v709
    %711 = vdwg.mxu0
    %712 = vxpose.xlu0.b32.start [1/16] %v701, 128
    %713 = vxpose.xlu0.b32.cont [2/16] 0.0, 128
    %714 = vxpose.xlu0.b32.cont [3/16] 0.0, 128
    %715 = vxpose.xlu0.b32.cont [4/16] 0.0, 128
    %716 = vxpose.xlu0.b32.cont [5/16] 0.0, 128
    %717 = vxpose.xlu0.b32.cont [6/16] 0.0, 128
    %718 = vxpose.xlu0.b32.cont [7/16] 0.0, 128
    %719 = vxpose.xlu0.b32.cont [8/16] 0.0, 128
    %720 = vxpose.xlu0.b32.cont [9/16] 0.0, 128
    %721 = vxpose.xlu0.b32.cont [10/16] 0.0, 128
    %722 = vxpose.xlu0.b32.cont [11/16] 0.0, 128
    %723 = vxpose.xlu0.b32.cont [12/16] 0.0, 128
    %724 = vxpose.xlu0.b32.cont [13/16] 0.0, 128
    %725 = vxpose.xlu0.b32.cont [14/16] 0.0, 128
    %726 = vxpose.xlu0.b32.cont [15/16] 0.0, 128
    %727 = vxpose.xlu0.b32.end [16/16] 0.0, 128
    %v728 = vpop.trf.xlu0
    %v729 = vpop.trf.xlu0
    %v730 = vpop.trf.xlu0
    %v731 = vpop.trf.xlu0
    %v732 = vpop.trf.xlu0
    %v733 = vpop.trf.xlu0
    %v734 = vpop.trf.xlu0
    %v735 = vpop.trf.xlu0
    %v736 = vpop.trf.xlu0
    %v737 = vpop.trf.xlu0
    %v738 = vpop.trf.xlu0
    %v739 = vpop.trf.xlu0
    %v740 = vpop.trf.xlu0
    %v741 = vpop.trf.xlu0
    %v742 = vpop.trf.xlu0
    %v743 = vpop.trf.xlu0
    %744 = vxpose.xlu0.b32.start [1/16] %v704, 128
    %745 = vxpose.xlu0.b32.cont [2/16] 0.0, 128
    %746 = vxpose.xlu0.b32.cont [3/16] 0.0, 128
    %747 = vxpose.xlu0.b32.cont [4/16] 0.0, 128
    %748 = vxpose.xlu0.b32.cont [5/16] 0.0, 128
    %749 = vxpose.xlu0.b32.cont [6/16] 0.0, 128
    %750 = vxpose.xlu0.b32.cont [7/16] 0.0, 128
    %751 = vxpose.xlu0.b32.cont [8/16] 0.0, 128
    %752 = vxpose.xlu0.b32.cont [9/16] 0.0, 128
    %753 = vxpose.xlu0.b32.cont [10/16] 0.0, 128
    %754 = vxpose.xlu0.b32.cont [11/16] 0.0, 128
    %755 = vxpose.xlu0.b32.cont [12/16] 0.0, 128
    %756 = vxpose.xlu0.b32.cont [13/16] 0.0, 128
    %757 = vxpose.xlu0.b32.cont [14/16] 0.0, 128
    %758 = vxpose.xlu0.b32.cont [15/16] 0.0, 128
    %759 = vxpose.xlu0.b32.end [16/16] 0.0, 128
    %v760 = vpop.trf.xlu0
    %v761 = vpop.trf.xlu0
    %v762 = vpop.trf.xlu0
    %v763 = vpop.trf.xlu0
    %v764 = vpop.trf.xlu0
    %v765 = vpop.trf.xlu0
    %v766 = vpop.trf.xlu0
    %v767 = vpop.trf.xlu0
    %v768 = vpop.trf.xlu0
    %v769 = vpop.trf.xlu0
    %v770 = vpop.trf.xlu0
    %v771 = vpop.trf.xlu0
    %v772 = vpop.trf.xlu0
    %v773 = vpop.trf.xlu0
    %v774 = vpop.trf.xlu0
    %v775 = vpop.trf.xlu0
    %776 = vxpose.xlu0.b32.start [1/16] %v707, 128
    %777 = vxpose.xlu0.b32.cont [2/16] 0.0, 128
    %778 = vxpose.xlu0.b32.cont [3/16] 0.0, 128
    %779 = vxpose.xlu0.b32.cont [4/16] 0.0, 128
    %780 = vxpose.xlu0.b32.cont [5/16] 0.0, 128
    %781 = vxpose.xlu0.b32.cont [6/16] 0.0, 128
    %782 = vxpose.xlu0.b32.cont [7/16] 0.0, 128
    %783 = vxpose.xlu0.b32.cont [8/16] 0.0, 128
    %784 = vxpose.xlu0.b32.cont [9/16] 0.0, 128
    %785 = vxpose.xlu0.b32.cont [10/16] 0.0, 128
    %786 = vxpose.xlu0.b32.cont [11/16] 0.0, 128
    %787 = vxpose.xlu0.b32.cont [12/16] 0.0, 128
    %788 = vxpose.xlu0.b32.cont [13/16] 0.0, 128
    %789 = vxpose.xlu0.b32.cont [14/16] 0.0, 128
    %790 = vxpose.xlu0.b32.cont [15/16] 0.0, 128
    %791 = vxpose.xlu0.b32.end [16/16] 0.0, 128
    %v792 = vpop.trf.xlu0
    %v793 = vpop.trf.xlu0
    %v794 = vpop.trf.xlu0
    %v795 = vpop.trf.xlu0
    %v796 = vpop.trf.xlu0
    %v797 = vpop.trf.xlu0
    %v798 = vpop.trf.xlu0
    %v799 = vpop.trf.xlu0
    %v800 = vpop.trf.xlu0
    %v801 = vpop.trf.xlu0
    %v802 = vpop.trf.xlu0
    %v803 = vpop.trf.xlu0
    %v804 = vpop.trf.xlu0
    %v805 = vpop.trf.xlu0
    %v806 = vpop.trf.xlu0
    %v807 = vpop.trf.xlu0
    %808 = vxpose.xlu0.b32.start [1/16] %v710, 128
    %809 = vxpose.xlu0.b32.cont [2/16] 0.0, 128
    %810 = vxpose.xlu0.b32.cont [3/16] 0.0, 128
    %811 = vxpose.xlu0.b32.cont [4/16] 0.0, 128
    %812 = vxpose.xlu0.b32.cont [5/16] 0.0, 128
    %813 = vxpose.xlu0.b32.cont [6/16] 0.0, 128
    %814 = vxpose.xlu0.b32.cont [7/16] 0.0, 128
    %815 = vxpose.xlu0.b32.cont [8/16] 0.0, 128
    %816 = vxpose.xlu0.b32.cont [9/16] 0.0, 128
    %817 = vxpose.xlu0.b32.cont [10/16] 0.0, 128
    %818 = vxpose.xlu0.b32.cont [11/16] 0.0, 128
    %819 = vxpose.xlu0.b32.cont [12/16] 0.0, 128
    %820 = vxpose.xlu0.b32.cont [13/16] 0.0, 128
    %821 = vxpose.xlu0.b32.cont [14/16] 0.0, 128
    %822 = vxpose.xlu0.b32.cont [15/16] 0.0, 128
    %823 = vxpose.xlu0.b32.end [16/16] 0.0, 128
    %v824 = vpop.trf.xlu0
    %v825 = vpop.trf.xlu0
    %v826 = vpop.trf.xlu0
    %v827 = vpop.trf.xlu0
    %v828 = vpop.trf.xlu0
    %v829 = vpop.trf.xlu0
    %v830 = vpop.trf.xlu0
    %v831 = vpop.trf.xlu0
    %v832 = vpop.trf.xlu0
    %v833 = vpop.trf.xlu0
    %v834 = vpop.trf.xlu0
    %v835 = vpop.trf.xlu0
    %v836 = vpop.trf.xlu0
    %v837 = vpop.trf.xlu0
    %v838 = vpop.trf.xlu0
    %v839 = vpop.trf.xlu0
    %v840 = vld [vmem:[#allocation2] sm:$0xff]
    %v841 = vld [vmem:[#allocation2 + $0x8] sm:$0xff]
    %v842 = vld [vmem:[#allocation2 + $0x10] sm:$0xff]
    %v843 = vld [vmem:[#allocation2 + $0x18] sm:$0xff]
    %v844 = vld [vmem:[#allocation2 + $0x20] sm:$0xff]
    %v845 = vld [vmem:[#allocation2 + $0x28] sm:$0xff]
    %v846 = vld [vmem:[#allocation2 + $0x30] sm:$0xff]
    %v847 = vld [vmem:[#allocation2 + $0x38] sm:$0xff]
    %v848 = vld [vmem:[#allocation2 + $0x40] sm:$0xff]
    %v849 = vld [vmem:[#allocation2 + $0x48] sm:$0xff]
    %v850 = vld [vmem:[#allocation2 + $0x50] sm:$0xff]
    %v851 = vld [vmem:[#allocation2 + $0x58] sm:$0xff]
    %v852 = vld [vmem:[#allocation2 + $0x60] sm:$0xff]
    %v853 = vld [vmem:[#allocation2 + $0x68] sm:$0xff]
    %v854 = vld [vmem:[#allocation2 + $0x70] sm:$0xff]
    %v855 = vld [vmem:[#allocation2 + $0x78] sm:$0xff]
    %v856 = vld [vmem:[%s6] sm:$0x1]
    %v857 = vperm.slane %v728, 0
    %v858 = vlaneseq
    %v859 = vshrl.u32 %v858, 7
    %861 = vset.pattern.permute.xlu0 %v859
    %862 = vperm.xlu0 %861, %v857
    %v863 = vpop.permute.xlu0 %862
    %v864 = vperm.slane %v728, 1
    %v865 = vlaneseq
    %v866 = vshrl.u32 %v865, 7
    %868 = vset.pattern.permute.xlu0 %v866
    %869 = vperm.xlu0 %868, %v864
    %v870 = vpop.permute.xlu0 %869
    %v871 = vperm.slane %v728, 2
    %v872 = vlaneseq
    %v873 = vshrl.u32 %v872, 7
    %875 = vset.pattern.permute.xlu0 %v873
    %876 = vperm.xlu0 %875, %v871
    %v877 = vpop.permute.xlu0 %876
    %v878 = vperm.slane %v728, 3
    %v879 = vlaneseq
    %v880 = vshrl.u32 %v879, 7
    %882 = vset.pattern.permute.xlu0 %v880
    %883 = vperm.xlu0 %882, %v878
    %v884 = vpop.permute.xlu0 %883
    %v885 = vperm.slane %v728, 4
    %v886 = vlaneseq
    %v887 = vshrl.u32 %v886, 7
    %889 = vset.pattern.permute.xlu0 %v887
    %890 = vperm.xlu0 %889, %v885
    %v891 = vpop.permute.xlu0 %890
    %v892 = vperm.slane %v728, 5
    %v893 = vlaneseq
    %v894 = vshrl.u32 %v893, 7
    %896 = vset.pattern.permute.xlu0 %v894
    %897 = vperm.xlu0 %896, %v892
    %v898 = vpop.permute.xlu0 %897
    %v899 = vperm.slane %v728, 6
    %v900 = vlaneseq
    %v901 = vshrl.u32 %v900, 7
    %903 = vset.pattern.permute.xlu0 %v901
    %904 = vperm.xlu0 %903, %v899
    %v905 = vpop.permute.xlu0 %904
    %v906 = vperm.slane %v728, 7
    %v907 = vlaneseq
    %v908 = vshrl.u32 %v907, 7
    %910 = vset.pattern.permute.xlu0 %v908
    %911 = vperm.xlu0 %910, %v906
    %v912 = vpop.permute.xlu0 %911
    %v913 = vperm.slane %v760, 0
    %v914 = vlaneseq
    %v915 = vshrl.u32 %v914, 7
    %917 = vset.pattern.permute.xlu0 %v915
    %918 = vperm.xlu0 %917, %v913
    %v919 = vpop.permute.xlu0 %918
    %v920 = vperm.slane %v760, 1
    %v921 = vlaneseq
    %v922 = vshrl.u32 %v921, 7
    %924 = vset.pattern.permute.xlu0 %v922
    %925 = vperm.xlu0 %924, %v920
    %v926 = vpop.permute.xlu0 %925
    %v927 = vperm.slane %v760, 2
    %v928 = vlaneseq
    %v929 = vshrl.u32 %v928, 7
    %931 = vset.pattern.permute.xlu0 %v929
    %932 = vperm.xlu0 %931, %v927
    %v933 = vpop.permute.xlu0 %932
    %v934 = vperm.slane %v760, 3
    %v935 = vlaneseq
    %v936 = vshrl.u32 %v935, 7
    %938 = vset.pattern.permute.xlu0 %v936
    %939 = vperm.xlu0 %938, %v934
    %v940 = vpop.permute.xlu0 %939
    %v941 = vperm.slane %v760, 4
    %v942 = vlaneseq
    %v943 = vshrl.u32 %v942, 7
    %945 = vset.pattern.permute.xlu0 %v943
    %946 = vperm.xlu0 %945, %v941
    %v947 = vpop.permute.xlu0 %946
    %v948 = vperm.slane %v760, 5
    %v949 = vlaneseq
    %v950 = vshrl.u32 %v949, 7
    %952 = vset.pattern.permute.xlu0 %v950
    %953 = vperm.xlu0 %952, %v948
    %v954 = vpop.permute.xlu0 %953
    %v955 = vperm.slane %v760, 6
    %v956 = vlaneseq
    %v957 = vshrl.u32 %v956, 7
    %959 = vset.pattern.permute.xlu0 %v957
    %960 = vperm.xlu0 %959, %v955
    %v961 = vpop.permute.xlu0 %960
    %v962 = vperm.slane %v760, 7
    %v963 = vlaneseq
    %v964 = vshrl.u32 %v963, 7
    %966 = vset.pattern.permute.xlu0 %v964
    %967 = vperm.xlu0 %966, %v962
    %v968 = vpop.permute.xlu0 %967
    %v969 = vperm.slane %v792, 0
    %v970 = vlaneseq
    %v971 = vshrl.u32 %v970, 7
    %973 = vset.pattern.permute.xlu0 %v971
    %974 = vperm.xlu0 %973, %v969
    %v975 = vpop.permute.xlu0 %974
    %v976 = vperm.slane %v792, 1
    %v977 = vlaneseq
    %v978 = vshrl.u32 %v977, 7
    %980 = vset.pattern.permute.xlu0 %v978
    %981 = vperm.xlu0 %980, %v976
    %v982 = vpop.permute.xlu0 %981
    %v983 = vperm.slane %v792, 2
    %v984 = vlaneseq
    %v985 = vshrl.u32 %v984, 7
    %987 = vset.pattern.permute.xlu0 %v985
    %988 = vperm.xlu0 %987, %v983
    %v989 = vpop.permute.xlu0 %988
    %v990 = vperm.slane %v792, 3
    %v991 = vlaneseq
    %v992 = vshrl.u32 %v991, 7
    %994 = vset.pattern.permute.xlu0 %v992
    %995 = vperm.xlu0 %994, %v990
    %v996 = vpop.permute.xlu0 %995
    %v997 = vperm.slane %v792, 4
    %v998 = vlaneseq
    %v999 = vshrl.u32 %v998, 7
    %1001 = vset.pattern.permute.xlu0 %v999
    %1002 = vperm.xlu0 %1001, %v997
    %v1003 = vpop.permute.xlu0 %1002
    %v1004 = vperm.slane %v792, 5
    %v1005 = vlaneseq
    %v1006 = vshrl.u32 %v1005, 7
    %1008 = vset.pattern.permute.xlu0 %v1006
    %1009 = vperm.xlu0 %1008, %v1004
    %v1010 = vpop.permute.xlu0 %1009
    %v1011 = vperm.slane %v792, 6
    %v1012 = vlaneseq
    %v1013 = vshrl.u32 %v1012, 7
    %1015 = vset.pattern.permute.xlu0 %v1013
    %1016 = vperm.xlu0 %1015, %v1011
    %v1017 = vpop.permute.xlu0 %1016
    %v1018 = vperm.slane %v792, 7
    %v1019 = vlaneseq
    %v1020 = vshrl.u32 %v1019, 7
    %1022 = vset.pattern.permute.xlu0 %v1020
    %1023 = vperm.xlu0 %1022, %v1018
    %v1024 = vpop.permute.xlu0 %1023
    %v1025 = vperm.slane %v824, 0
    %v1026 = vlaneseq
    %v1027 = vshrl.u32 %v1026, 7
    %1029 = vset.pattern.permute.xlu0 %v1027
    %1030 = vperm.xlu0 %1029, %v1025
    %v1031 = vpop.permute.xlu0 %1030
    %v1032 = vperm.slane %v824, 1
    %v1033 = vlaneseq
    %v1034 = vshrl.u32 %v1033, 7
    %1036 = vset.pattern.permute.xlu0 %v1034
    %1037 = vperm.xlu0 %1036, %v1032
    %v1038 = vpop.permute.xlu0 %1037
    %v1039 = vperm.slane %v824, 2
    %v1040 = vlaneseq
    %v1041 = vshrl.u32 %v1040, 7
    %1043 = vset.pattern.permute.xlu0 %v1041
    %1044 = vperm.xlu0 %1043, %v1039
    %v1045 = vpop.permute.xlu0 %1044
    %v1046 = vperm.slane %v824, 3
    %v1047 = vlaneseq
    %v1048 = vshrl.u32 %v1047, 7
    %1050 = vset.pattern.permute.xlu0 %v1048
    %1051 = vperm.xlu0 %1050, %v1046
    %v1052 = vpop.permute.xlu0 %1051
    %v1053 = vperm.slane %v824, 4
    %v1054 = vlaneseq
    %v1055 = vshrl.u32 %v1054, 7
    %1057 = vset.pattern.permute.xlu0 %v1055
    %1058 = vperm.xlu0 %1057, %v1053
    %v1059 = vpop.permute.xlu0 %1058
    %v1060 = vperm.slane %v824, 5
    %v1061 = vlaneseq
    %v1062 = vshrl.u32 %v1061, 7
    %1064 = vset.pattern.permute.xlu0 %v1062
    %1065 = vperm.xlu0 %1064, %v1060
    %v1066 = vpop.permute.xlu0 %1065
    %v1067 = vperm.slane %v824, 6
    %v1068 = vlaneseq
    %v1069 = vshrl.u32 %v1068, 7
    %1071 = vset.pattern.permute.xlu0 %v1069
    %1072 = vperm.xlu0 %1071, %v1067
    %v1073 = vpop.permute.xlu0 %1072
    %v1074 = vperm.slane %v824, 7
    %v1075 = vlaneseq
    %v1076 = vshrl.u32 %v1075, 7
    %1078 = vset.pattern.permute.xlu0 %v1076
    %1079 = vperm.xlu0 %1078, %v1074
    %v1080 = vpop.permute.xlu0 %1079
    %v1085 = vrot.slane %v840, 1
    %v1086 = vrot.slane %v840, 2
    %v1087 = vrot.slane %v840, 3
    %v1088 = vrot.slane %v840, 4
    %v1089 = vrot.slane %v840, 5
    %v1090 = vrot.slane %v840, 6
    %v1091 = vrot.slane %v840, 7
    %v1092 = vrot.slane %v844, 1
    %v1093 = vrot.slane %v844, 2
    %v1094 = vrot.slane %v844, 3
    %v1095 = vrot.slane %v844, 4
    %v1096 = vrot.slane %v844, 5
    %v1097 = vrot.slane %v844, 6
    %v1098 = vrot.slane %v844, 7
    %v1099 = vrot.slane %v848, 1
    %v1100 = vrot.slane %v848, 2
    %v1101 = vrot.slane %v848, 3
    %v1102 = vrot.slane %v848, 4
    %v1103 = vrot.slane %v848, 5
    %v1104 = vrot.slane %v848, 6
    %v1105 = vrot.slane %v848, 7
    %v1106 = vrot.slane %v852, 1
    %v1107 = vrot.slane %v852, 2
    %v1108 = vrot.slane %v852, 3
    %v1109 = vrot.slane %v852, 4
    %v1110 = vrot.slane %v852, 5
    %v1111 = vrot.slane %v852, 6
    %v1112 = vrot.slane %v852, 7
    %v1113 = vperm.slane %v840, 0
    %v1114 = vperm.slane %v1085, 0
    %v1115 = vperm.slane %v1086, 0
    %v1116 = vperm.slane %v1087, 0
    %v1117 = vperm.slane %v1088, 0
    %v1118 = vperm.slane %v1089, 0
    %v1119 = vperm.slane %v1090, 0
    %v1120 = vperm.slane %v1091, 0
    %v1121 = vperm.slane %v844, 0
    %v1122 = vperm.slane %v1092, 0
    %v1123 = vperm.slane %v1093, 0
    %v1124 = vperm.slane %v1094, 0
    %v1125 = vperm.slane %v1095, 0
    %v1126 = vperm.slane %v1096, 0
    %v1127 = vperm.slane %v1097, 0
    %v1128 = vperm.slane %v1098, 0
    %v1129 = vperm.slane %v848, 0
    %v1130 = vperm.slane %v1099, 0
    %v1131 = vperm.slane %v1100, 0
    %v1132 = vperm.slane %v1101, 0
    %v1133 = vperm.slane %v1102, 0
    %v1134 = vperm.slane %v1103, 0
    %v1135 = vperm.slane %v1104, 0
    %v1136 = vperm.slane %v1105, 0
    %v1137 = vperm.slane %v852, 0
    %v1138 = vperm.slane %v1106, 0
    %v1139 = vperm.slane %v1107, 0
    %v1140 = vperm.slane %v1108, 0
    %v1141 = vperm.slane %v1109, 0
    %v1142 = vperm.slane %v1110, 0
    %v1143 = vperm.slane %v1111, 0
    %v1144 = vperm.slane %v1112, 0
    %v1177 = vadd.f32 %v863, %v1113
    %v1178 = vadd.f32 %v870, %v1114
    %v1179 = vadd.f32 %v877, %v1115
    %v1180 = vadd.f32 %v884, %v1116
    %v1181 = vadd.f32 %v891, %v1117
    %v1182 = vadd.f32 %v898, %v1118
    %v1183 = vadd.f32 %v905, %v1119
    %v1184 = vadd.f32 %v912, %v1120
    %v1185 = vadd.f32 %v919, %v1121
    %v1186 = vadd.f32 %v926, %v1122
    %v1187 = vadd.f32 %v933, %v1123
    %v1188 = vadd.f32 %v940, %v1124
    %v1189 = vadd.f32 %v947, %v1125
    %v1190 = vadd.f32 %v954, %v1126
    %v1191 = vadd.f32 %v961, %v1127
    %v1192 = vadd.f32 %v968, %v1128
    %v1193 = vadd.f32 %v975, %v1129
    %v1194 = vadd.f32 %v982, %v1130
    %v1195 = vadd.f32 %v989, %v1131
    %v1196 = vadd.f32 %v996, %v1132
    %v1197 = vadd.f32 %v1003, %v1133
    %v1198 = vadd.f32 %v1010, %v1134
    %v1199 = vadd.f32 %v1017, %v1135
    %v1200 = vadd.f32 %v1024, %v1136
    %v1201 = vadd.f32 %v1031, %v1137
    %v1202 = vadd.f32 %v1038, %v1138
    %v1203 = vadd.f32 %v1045, %v1139
    %v1204 = vadd.f32 %v1052, %v1140
    %v1205 = vadd.f32 %v1059, %v1141
    %v1206 = vadd.f32 %v1066, %v1142
    %v1207 = vadd.f32 %v1073, %v1143
    %v1208 = vadd.f32 %v1080, %v1144
    %v1209 = vtanh.pop %v1177
    %v1210 = vtanh.pop %v1178
    %v1211 = vtanh.pop %v1179
    %v1212 = vtanh.pop %v1180
    %v1213 = vtanh.pop %v1181
    %v1214 = vtanh.pop %v1182
    %v1215 = vtanh.pop %v1183
    %v1216 = vtanh.pop %v1184
    %v1217 = vtanh.pop %v1185
    %v1218 = vtanh.pop %v1186
    %v1219 = vtanh.pop %v1187
    %v1220 = vtanh.pop %v1188
    %v1221 = vtanh.pop %v1189
    %v1222 = vtanh.pop %v1190
    %v1223 = vtanh.pop %v1191
    %v1224 = vtanh.pop %v1192
    %v1225 = vtanh.pop %v1193
    %v1226 = vtanh.pop %v1194
    %v1227 = vtanh.pop %v1195
    %v1228 = vtanh.pop %v1196
    %v1229 = vtanh.pop %v1197
    %v1230 = vtanh.pop %v1198
    %v1231 = vtanh.pop %v1199
    %v1232 = vtanh.pop %v1200
    %v1233 = vtanh.pop %v1201
    %v1234 = vtanh.pop %v1202
    %v1235 = vtanh.pop %v1203
    %v1236 = vtanh.pop %v1204
    %v1237 = vtanh.pop %v1205
    %v1238 = vtanh.pop %v1206
    %v1239 = vtanh.pop %v1207
    %v1240 = vtanh.pop %v1208
    %v1241 = vperm.slane %v856, 0
    %v1242 = vlaneseq
    %v1243 = vshrl.u32 %v1242, 7
    %1245 = vset.pattern.permute.xlu0 %v1243
    %1246 = vperm.xlu0 %1245, %v1241
    %v1247 = vpop.permute.xlu0 %1246
    %v1248 = vperm.slane %v1247, 0
    %v1249 = vperm.slane %v1247, 1
    %v1250 = vperm.slane %v1247, 2
    %v1251 = vperm.slane %v1247, 3
    %v1252 = vperm.slane %v1247, 4
    %v1253 = vperm.slane %v1247, 5
    %v1254 = vperm.slane %v1247, 6
    %v1255 = vperm.slane %v1247, 7
    %v1256 = vmul.f32 %v1209, %v1248
    %v1257 = vmul.f32 %v1210, %v1249
    %v1258 = vmul.f32 %v1211, %v1250
    %v1259 = vmul.f32 %v1212, %v1251
    %v1260 = vmul.f32 %v1213, %v1252
    %v1261 = vmul.f32 %v1214, %v1253
    %v1262 = vmul.f32 %v1215, %v1254
    %v1263 = vmul.f32 %v1216, %v1255
    %v1264 = vmul.f32 %v1217, %v1248
    %v1265 = vmul.f32 %v1218, %v1249
    %v1266 = vmul.f32 %v1219, %v1250
    %v1267 = vmul.f32 %v1220, %v1251
    %v1268 = vmul.f32 %v1221, %v1252
    %v1269 = vmul.f32 %v1222, %v1253
    %v1270 = vmul.f32 %v1223, %v1254
    %v1271 = vmul.f32 %v1224, %v1255
    %v1272 = vmul.f32 %v1225, %v1248
    %v1273 = vmul.f32 %v1226, %v1249
    %v1274 = vmul.f32 %v1227, %v1250
    %v1275 = vmul.f32 %v1228, %v1251
    %v1276 = vmul.f32 %v1229, %v1252
    %v1277 = vmul.f32 %v1230, %v1253
    %v1278 = vmul.f32 %v1231, %v1254
    %v1279 = vmul.f32 %v1232, %v1255
    %v1280 = vmul.f32 %v1233, %v1248
    %v1281 = vmul.f32 %v1234, %v1249
    %v1282 = vmul.f32 %v1235, %v1250
    %v1283 = vmul.f32 %v1236, %v1251
    %v1284 = vmul.f32 %v1237, %v1252
    %v1285 = vmul.f32 %v1238, %v1253
    %v1286 = vmul.f32 %v1239, %v1254
    %v1287 = vmul.f32 %v1240, %v1255
    %v1288 = vadd.f32 %v1256, %v1257
    %v1289 = vadd.f32 %v1288, %v1258
    %v1290 = vadd.f32 %v1289, %v1259
    %v1291 = vadd.f32 %v1290, %v1260
    %v1292 = vadd.f32 %v1291, %v1261
    %v1293 = vadd.f32 %v1292, %v1262
    %v1294 = vadd.f32 %v1293, %v1263
    %v1295 = vadd.f32 %v1264, %v1265
    %v1296 = vadd.f32 %v1295, %v1266
    %v1297 = vadd.f32 %v1296, %v1267
    %v1298 = vadd.f32 %v1297, %v1268
    %v1299 = vadd.f32 %v1298, %v1269
    %v1300 = vadd.f32 %v1299, %v1270
    %v1301 = vadd.f32 %v1300, %v1271
    %v1302 = vadd.f32 %v1272, %v1273
    %v1303 = vadd.f32 %v1302, %v1274
    %v1304 = vadd.f32 %v1303, %v1275
    %v1305 = vadd.f32 %v1304, %v1276
    %v1306 = vadd.f32 %v1305, %v1277
    %v1307 = vadd.f32 %v1306, %v1278
    %v1308 = vadd.f32 %v1307, %v1279
    %v1309 = vadd.f32 %v1280, %v1281
    %v1310 = vadd.f32 %v1309, %v1282
    %v1311 = vadd.f32 %v1310, %v1283
    %v1312 = vadd.f32 %v1311, %v1284
    %v1313 = vadd.f32 %v1312, %v1285
    %v1314 = vadd.f32 %v1313, %v1286
    %v1315 = vadd.f32 %v1314, %v1287
    %v1316 = vadd.f32 %v1294, 0.0
    %v1317 = vadd.f32 %v1301, 0.0
    %v1318 = vadd.f32 %v1308, 0.0
    %v1319 = vadd.f32 %v1315, 0.0
    %v1320 = vperm.slane %v729, 0
    %v1321 = vlaneseq
    %v1322 = vshrl.u32 %v1321, 7
    %1324 = vset.pattern.permute.xlu0 %v1322
    %1325 = vperm.xlu0 %1324, %v1320
    %v1326 = vpop.permute.xlu0 %1325
    %v1327 = vperm.slane %v729, 1
    %v1328 = vlaneseq
    %v1329 = vshrl.u32 %v1328, 7
    %1331 = vset.pattern.permute.xlu0 %v1329
    %1332 = vperm.xlu0 %1331, %v1327
    %v1333 = vpop.permute.xlu0 %1332
    %v1334 = vperm.slane %v729, 2
    %v1335 = vlaneseq
    %v1336 = vshrl.u32 %v1335, 7
    %1338 = vset.pattern.permute.xlu0 %v1336
    %1339 = vperm.xlu0 %1338, %v1334
    %v1340 = vpop.permute.xlu0 %1339
    %v1341 = vperm.slane %v729, 3
    %v1342 = vlaneseq
    %v1343 = vshrl.u32 %v1342, 7
    %1345 = vset.pattern.permute.xlu0 %v1343
    %1346 = vperm.xlu0 %1345, %v1341
    %v1347 = vpop.permute.xlu0 %1346
    %v1348 = vperm.slane %v729, 4
    %v1349 = vlaneseq
    %v1350 = vshrl.u32 %v1349, 7
    %1352 = vset.pattern.permute.xlu0 %v1350
    %1353 = vperm.xlu0 %1352, %v1348
    %v1354 = vpop.permute.xlu0 %1353
    %v1355 = vperm.slane %v729, 5
    %v1356 = vlaneseq
    %v1357 = vshrl.u32 %v1356, 7
    %1359 = vset.pattern.permute.xlu0 %v1357
    %1360 = vperm.xlu0 %1359, %v1355
    %v1361 = vpop.permute.xlu0 %1360
    %v1362 = vperm.slane %v729, 6
    %v1363 = vlaneseq
    %v1364 = vshrl.u32 %v1363, 7
    %1366 = vset.pattern.permute.xlu0 %v1364
    %1367 = vperm.xlu0 %1366, %v1362
    %v1368 = vpop.permute.xlu0 %1367
    %v1369 = vperm.slane %v729, 7
    %v1370 = vlaneseq
    %v1371 = vshrl.u32 %v1370, 7
    %1373 = vset.pattern.permute.xlu0 %v1371
    %1374 = vperm.xlu0 %1373, %v1369
    %v1375 = vpop.permute.xlu0 %1374
    %v1376 = vperm.slane %v761, 0
    %v1377 = vlaneseq
    %v1378 = vshrl.u32 %v1377, 7
    %1380 = vset.pattern.permute.xlu0 %v1378
    %1381 = vperm.xlu0 %1380, %v1376
    %v1382 = vpop.permute.xlu0 %1381
    %v1383 = vperm.slane %v761, 1
    %v1384 = vlaneseq
    %v1385 = vshrl.u32 %v1384, 7
    %1387 = vset.pattern.permute.xlu0 %v1385
    %1388 = vperm.xlu0 %1387, %v1383
    %v1389 = vpop.permute.xlu0 %1388
    %v1390 = vperm.slane %v761, 2
    %v1391 = vlaneseq
    %v1392 = vshrl.u32 %v1391, 7
    %1394 = vset.pattern.permute.xlu0 %v1392
    %1395 = vperm.xlu0 %1394, %v1390
    %v1396 = vpop.permute.xlu0 %1395
    %v1397 = vperm.slane %v761, 3
    %v1398 = vlaneseq
    %v1399 = vshrl.u32 %v1398, 7
    %1401 = vset.pattern.permute.xlu0 %v1399
    %1402 = vperm.xlu0 %1401, %v1397
    %v1403 = vpop.permute.xlu0 %1402
    %v1404 = vperm.slane %v761, 4
    %v1405 = vlaneseq
    %v1406 = vshrl.u32 %v1405, 7
    %1408 = vset.pattern.permute.xlu0 %v1406
    %1409 = vperm.xlu0 %1408, %v1404
    %v1410 = vpop.permute.xlu0 %1409
    %v1411 = vperm.slane %v761, 5
    %v1412 = vlaneseq
    %v1413 = vshrl.u32 %v1412, 7
    %1415 = vset.pattern.permute.xlu0 %v1413
    %1416 = vperm.xlu0 %1415, %v1411
    %v1417 = vpop.permute.xlu0 %1416
    %v1418 = vperm.slane %v761, 6
    %v1419 = vlaneseq
    %v1420 = vshrl.u32 %v1419, 7
    %1422 = vset.pattern.permute.xlu0 %v1420
    %1423 = vperm.xlu0 %1422, %v1418
    %v1424 = vpop.permute.xlu0 %1423
    %v1425 = vperm.slane %v761, 7
    %v1426 = vlaneseq
    %v1427 = vshrl.u32 %v1426, 7
    %1429 = vset.pattern.permute.xlu0 %v1427
    %1430 = vperm.xlu0 %1429, %v1425
    %v1431 = vpop.permute.xlu0 %1430
    %v1432 = vperm.slane %v793, 0
    %v1433 = vlaneseq
    %v1434 = vshrl.u32 %v1433, 7
    %1436 = vset.pattern.permute.xlu0 %v1434
    %1437 = vperm.xlu0 %1436, %v1432
    %v1438 = vpop.permute.xlu0 %1437
    %v1439 = vperm.slane %v793, 1
    %v1440 = vlaneseq
    %v1441 = vshrl.u32 %v1440, 7
    %1443 = vset.pattern.permute.xlu0 %v1441
    %1444 = vperm.xlu0 %1443, %v1439
    %v1445 = vpop.permute.xlu0 %1444
    %v1446 = vperm.slane %v793, 2
    %v1447 = vlaneseq
    %v1448 = vshrl.u32 %v1447, 7
    %1450 = vset.pattern.permute.xlu0 %v1448
    %1451 = vperm.xlu0 %1450, %v1446
    %v1452 = vpop.permute.xlu0 %1451
    %v1453 = vperm.slane %v793, 3
    %v1454 = vlaneseq
    %v1455 = vshrl.u32 %v1454, 7
    %1457 = vset.pattern.permute.xlu0 %v1455
    %1458 = vperm.xlu0 %1457, %v1453
    %v1459 = vpop.permute.xlu0 %1458
    %v1460 = vperm.slane %v793, 4
    %v1461 = vlaneseq
    %v1462 = vshrl.u32 %v1461, 7
    %1464 = vset.pattern.permute.xlu0 %v1462
    %1465 = vperm.xlu0 %1464, %v1460
    %v1466 = vpop.permute.xlu0 %1465
    %v1467 = vperm.slane %v793, 5
    %v1468 = vlaneseq
    %v1469 = vshrl.u32 %v1468, 7
    %1471 = vset.pattern.permute.xlu0 %v1469
    %1472 = vperm.xlu0 %1471, %v1467
    %v1473 = vpop.permute.xlu0 %1472
    %v1474 = vperm.slane %v793, 6
    %v1475 = vlaneseq
    %v1476 = vshrl.u32 %v1475, 7
    %1478 = vset.pattern.permute.xlu0 %v1476
    %1479 = vperm.xlu0 %1478, %v1474
    %v1480 = vpop.permute.xlu0 %1479
    %v1481 = vperm.slane %v793, 7
    %v1482 = vlaneseq
    %v1483 = vshrl.u32 %v1482, 7
    %1485 = vset.pattern.permute.xlu0 %v1483
    %1486 = vperm.xlu0 %1485, %v1481
    %v1487 = vpop.permute.xlu0 %1486
    %v1488 = vperm.slane %v825, 0
    %v1489 = vlaneseq
    %v1490 = vshrl.u32 %v1489, 7
    %1492 = vset.pattern.permute.xlu0 %v1490
    %1493 = vperm.xlu0 %1492, %v1488
    %v1494 = vpop.permute.xlu0 %1493
    %v1495 = vperm.slane %v825, 1
    %v1496 = vlaneseq
    %v1497 = vshrl.u32 %v1496, 7
    %1499 = vset.pattern.permute.xlu0 %v1497
    %1500 = vperm.xlu0 %1499, %v1495
    %v1501 = vpop.permute.xlu0 %1500
    %v1502 = vperm.slane %v825, 2
    %v1503 = vlaneseq
    %v1504 = vshrl.u32 %v1503, 7
    %1506 = vset.pattern.permute.xlu0 %v1504
    %1507 = vperm.xlu0 %1506, %v1502
    %v1508 = vpop.permute.xlu0 %1507
    %v1509 = vperm.slane %v825, 3
    %v1510 = vlaneseq
    %v1511 = vshrl.u32 %v1510, 7
    %1513 = vset.pattern.permute.xlu0 %v1511
    %1514 = vperm.xlu0 %1513, %v1509
    %v1515 = vpop.permute.xlu0 %1514
    %v1516 = vperm.slane %v825, 4
    %v1517 = vlaneseq
    %v1518 = vshrl.u32 %v1517, 7
    %1520 = vset.pattern.permute.xlu0 %v1518
    %1521 = vperm.xlu0 %1520, %v1516
    %v1522 = vpop.permute.xlu0 %1521
    %v1523 = vperm.slane %v825, 5
    %v1524 = vlaneseq
    %v1525 = vshrl.u32 %v1524, 7
    %1527 = vset.pattern.permute.xlu0 %v1525
    %1528 = vperm.xlu0 %1527, %v1523
    %v1529 = vpop.permute.xlu0 %1528
    %v1530 = vperm.slane %v825, 6
    %v1531 = vlaneseq
    %v1532 = vshrl.u32 %v1531, 7
    %1534 = vset.pattern.permute.xlu0 %v1532
    %1535 = vperm.xlu0 %1534, %v1530
    %v1536 = vpop.permute.xlu0 %1535
    %v1537 = vperm.slane %v825, 7
    %v1538 = vlaneseq
    %v1539 = vshrl.u32 %v1538, 7
    %1541 = vset.pattern.permute.xlu0 %v1539
    %1542 = vperm.xlu0 %1541, %v1537
    %v1543 = vpop.permute.xlu0 %1542
    %v1548 = vrot.slane %v841, 1
    %v1549 = vrot.slane %v841, 2
    %v1550 = vrot.slane %v841, 3
    %v1551 = vrot.slane %v841, 4
    %v1552 = vrot.slane %v841, 5
    %v1553 = vrot.slane %v841, 6
    %v1554 = vrot.slane %v841, 7
    %v1555 = vrot.slane %v845, 1
    %v1556 = vrot.slane %v845, 2
    %v1557 = vrot.slane %v845, 3
    %v1558 = vrot.slane %v845, 4
    %v1559 = vrot.slane %v845, 5
    %v1560 = vrot.slane %v845, 6
    %v1561 = vrot.slane %v845, 7
    %v1562 = vrot.slane %v849, 1
    %v1563 = vrot.slane %v849, 2
    %v1564 = vrot.slane %v849, 3
    %v1565 = vrot.slane %v849, 4
    %v1566 = vrot.slane %v849, 5
    %v1567 = vrot.slane %v849, 6
    %v1568 = vrot.slane %v849, 7
    %v1569 = vrot.slane %v853, 1
    %v1570 = vrot.slane %v853, 2
    %v1571 = vrot.slane %v853, 3
    %v1572 = vrot.slane %v853, 4
    %v1573 = vrot.slane %v853, 5
    %v1574 = vrot.slane %v853, 6
    %v1575 = vrot.slane %v853, 7
    %v1576 = vperm.slane %v841, 0
    %v1577 = vperm.slane %v1548, 0
    %v1578 = vperm.slane %v1549, 0
    %v1579 = vperm.slane %v1550, 0
    %v1580 = vperm.slane %v1551, 0
    %v1581 = vperm.slane %v1552, 0
    %v1582 = vperm.slane %v1553, 0
    %v1583 = vperm.slane %v1554, 0
    %v1584 = vperm.slane %v845, 0
    %v1585 = vperm.slane %v1555, 0
    %v1586 = vperm.slane %v1556, 0
    %v1587 = vperm.slane %v1557, 0
    %v1588 = vperm.slane %v1558, 0
    %v1589 = vperm.slane %v1559, 0
    %v1590 = vperm.slane %v1560, 0
    %v1591 = vperm.slane %v1561, 0
    %v1592 = vperm.slane %v849, 0
    %v1593 = vperm.slane %v1562, 0
    %v1594 = vperm.slane %v1563, 0
    %v1595 = vperm.slane %v1564, 0
    %v1596 = vperm.slane %v1565, 0
    %v1597 = vperm.slane %v1566, 0
    %v1598 = vperm.slane %v1567, 0
    %v1599 = vperm.slane %v1568, 0
    %v1600 = vperm.slane %v853, 0
    %v1601 = vperm.slane %v1569, 0
    %v1602 = vperm.slane %v1570, 0
    %v1603 = vperm.slane %v1571, 0
    %v1604 = vperm.slane %v1572, 0
    %v1605 = vperm.slane %v1573, 0
    %v1606 = vperm.slane %v1574, 0
    %v1607 = vperm.slane %v1575, 0
    %v1640 = vadd.f32 %v1326, %v1576
    %v1641 = vadd.f32 %v1333, %v1577
    %v1642 = vadd.f32 %v1340, %v1578
    %v1643 = vadd.f32 %v1347, %v1579
    %v1644 = vadd.f32 %v1354, %v1580
    %v1645 = vadd.f32 %v1361, %v1581
    %v1646 = vadd.f32 %v1368, %v1582
    %v1647 = vadd.f32 %v1375, %v1583
    %v1648 = vadd.f32 %v1382, %v1584
    %v1649 = vadd.f32 %v1389, %v1585
    %v1650 = vadd.f32 %v1396, %v1586
    %v1651 = vadd.f32 %v1403, %v1587
    %v1652 = vadd.f32 %v1410, %v1588
    %v1653 = vadd.f32 %v1417, %v1589
    %v1654 = vadd.f32 %v1424, %v1590
    %v1655 = vadd.f32 %v1431, %v1591
    %v1656 = vadd.f32 %v1438, %v1592
    %v1657 = vadd.f32 %v1445, %v1593
    %v1658 = vadd.f32 %v1452, %v1594
    %v1659 = vadd.f32 %v1459, %v1595
    %v1660 = vadd.f32 %v1466, %v1596
    %v1661 = vadd.f32 %v1473, %v1597
    %v1662 = vadd.f32 %v1480, %v1598
    %v1663 = vadd.f32 %v1487, %v1599
    %v1664 = vadd.f32 %v1494, %v1600
    %v1665 = vadd.f32 %v1501, %v1601
    %v1666 = vadd.f32 %v1508, %v1602
    %v1667 = vadd.f32 %v1515, %v1603
    %v1668 = vadd.f32 %v1522, %v1604
    %v1669 = vadd.f32 %v1529, %v1605
    %v1670 = vadd.f32 %v1536, %v1606
    %v1671 = vadd.f32 %v1543, %v1607
    %v1672 = vtanh.pop %v1640
    %v1673 = vtanh.pop %v1641
    %v1674 = vtanh.pop %v1642
    %v1675 = vtanh.pop %v1643
    %v1676 = vtanh.pop %v1644
    %v1677 = vtanh.pop %v1645
    %v1678 = vtanh.pop %v1646
    %v1679 = vtanh.pop %v1647
    %v1680 = vtanh.pop %v1648
    %v1681 = vtanh.pop %v1649
    %v1682 = vtanh.pop %v1650
    %v1683 = vtanh.pop %v1651
    %v1684 = vtanh.pop %v1652
    %v1685 = vtanh.pop %v1653
    %v1686 = vtanh.pop %v1654
    %v1687 = vtanh.pop %v1655
    %v1688 = vtanh.pop %v1656
    %v1689 = vtanh.pop %v1657
    %v1690 = vtanh.pop %v1658
    %v1691 = vtanh.pop %v1659
    %v1692 = vtanh.pop %v1660
    %v1693 = vtanh.pop %v1661
    %v1694 = vtanh.pop %v1662
    %v1695 = vtanh.pop %v1663
    %v1696 = vtanh.pop %v1664
    %v1697 = vtanh.pop %v1665
    %v1698 = vtanh.pop %v1666
    %v1699 = vtanh.pop %v1667
    %v1700 = vtanh.pop %v1668
    %v1701 = vtanh.pop %v1669
    %v1702 = vtanh.pop %v1670
    %v1703 = vtanh.pop %v1671
    %v1704 = vlaneseq
    %v1705 = vshrl.u32 %v1704, 7
    %v1706 = vadd.s32 %v1705, 8
    %1707 = vset.pattern.permute.xlu0 %v1706
    %1708 = vperm.xlu0 %1707, %v1241
    %v1709 = vpop.permute.xlu0 %1708
    %v1710 = vperm.slane %v1709, 0
    %v1711 = vperm.slane %v1709, 1
    %v1712 = vperm.slane %v1709, 2
    %v1713 = vperm.slane %v1709, 3
    %v1714 = vperm.slane %v1709, 4
    %v1715 = vperm.slane %v1709, 5
    %v1716 = vperm.slane %v1709, 6
    %v1717 = vperm.slane %v1709, 7
    %v1718 = vmul.f32 %v1672, %v1710
    %v1719 = vmul.f32 %v1673, %v1711
    %v1720 = vmul.f32 %v1674, %v1712
    %v1721 = vmul.f32 %v1675, %v1713
    %v1722 = vmul.f32 %v1676, %v1714
    %v1723 = vmul.f32 %v1677, %v1715
    %v1724 = vmul.f32 %v1678, %v1716
    %v1725 = vmul.f32 %v1679, %v1717
    %v1726 = vmul.f32 %v1680, %v1710
    %v1727 = vmul.f32 %v1681, %v1711
    %v1728 = vmul.f32 %v1682, %v1712
    %v1729 = vmul.f32 %v1683, %v1713
    %v1730 = vmul.f32 %v1684, %v1714
    %v1731 = vmul.f32 %v1685, %v1715
    %v1732 = vmul.f32 %v1686, %v1716
    %v1733 = vmul.f32 %v1687, %v1717
    %v1734 = vmul.f32 %v1688, %v1710
    %v1735 = vmul.f32 %v1689, %v1711
    %v1736 = vmul.f32 %v1690, %v1712
    %v1737 = vmul.f32 %v1691, %v1713
    %v1738 = vmul.f32 %v1692, %v1714
    %v1739 = vmul.f32 %v1693, %v1715
    %v1740 = vmul.f32 %v1694, %v1716
    %v1741 = vmul.f32 %v1695, %v1717
    %v1742 = vmul.f32 %v1696, %v1710
    %v1743 = vmul.f32 %v1697, %v1711
    %v1744 = vmul.f32 %v1698, %v1712
    %v1745 = vmul.f32 %v1699, %v1713
    %v1746 = vmul.f32 %v1700, %v1714
    %v1747 = vmul.f32 %v1701, %v1715
    %v1748 = vmul.f32 %v1702, %v1716
    %v1749 = vmul.f32 %v1703, %v1717
    %v1750 = vadd.f32 %v1718, %v1719
    %v1751 = vadd.f32 %v1750, %v1720
    %v1752 = vadd.f32 %v1751, %v1721
    %v1753 = vadd.f32 %v1752, %v1722
    %v1754 = vadd.f32 %v1753, %v1723
    %v1755 = vadd.f32 %v1754, %v1724
    %v1756 = vadd.f32 %v1755, %v1725
    %v1757 = vadd.f32 %v1726, %v1727
    %v1758 = vadd.f32 %v1757, %v1728
    %v1759 = vadd.f32 %v1758, %v1729
    %v1760 = vadd.f32 %v1759, %v1730
    %v1761 = vadd.f32 %v1760, %v1731
    %v1762 = vadd.f32 %v1761, %v1732
    %v1763 = vadd.f32 %v1762, %v1733
    %v1764 = vadd.f32 %v1734, %v1735
    %v1765 = vadd.f32 %v1764, %v1736
    %v1766 = vadd.f32 %v1765, %v1737
    %v1767 = vadd.f32 %v1766, %v1738
    %v1768 = vadd.f32 %v1767, %v1739
    %v1769 = vadd.f32 %v1768, %v1740
    %v1770 = vadd.f32 %v1769, %v1741
    %v1771 = vadd.f32 %v1742, %v1743
    %v1772 = vadd.f32 %v1771, %v1744
    %v1773 = vadd.f32 %v1772, %v1745
    %v1774 = vadd.f32 %v1773, %v1746
    %v1775 = vadd.f32 %v1774, %v1747
    %v1776 = vadd.f32 %v1775, %v1748
    %v1777 = vadd.f32 %v1776, %v1749
    %v1778 = vadd.f32 %v1316, %v1756
    %v1779 = vadd.f32 %v1317, %v1763
    %v1780 = vadd.f32 %v1318, %v1770
    %v1781 = vadd.f32 %v1319, %v1777
    %v1782 = vperm.slane %v730, 0
    %v1783 = vlaneseq
    %v1784 = vshrl.u32 %v1783, 7
    %1786 = vset.pattern.permute.xlu0 %v1784
    %1787 = vperm.xlu0 %1786, %v1782
    %v1788 = vpop.permute.xlu0 %1787
    %v1789 = vperm.slane %v730, 1
    %v1790 = vlaneseq
    %v1791 = vshrl.u32 %v1790, 7
    %1793 = vset.pattern.permute.xlu0 %v1791
    %1794 = vperm.xlu0 %1793, %v1789
    %v1795 = vpop.permute.xlu0 %1794
    %v1796 = vperm.slane %v730, 2
    %v1797 = vlaneseq
    %v1798 = vshrl.u32 %v1797, 7
    %1800 = vset.pattern.permute.xlu0 %v1798
    %1801 = vperm.xlu0 %1800, %v1796
    %v1802 = vpop.permute.xlu0 %1801
    %v1803 = vperm.slane %v730, 3
    %v1804 = vlaneseq
    %v1805 = vshrl.u32 %v1804, 7
    %1807 = vset.pattern.permute.xlu0 %v1805
    %1808 = vperm.xlu0 %1807, %v1803
    %v1809 = vpop.permute.xlu0 %1808
    %v1810 = vperm.slane %v730, 4
    %v1811 = vlaneseq
    %v1812 = vshrl.u32 %v1811, 7
    %1814 = vset.pattern.permute.xlu0 %v1812
    %1815 = vperm.xlu0 %1814, %v1810
    %v1816 = vpop.permute.xlu0 %1815
    %v1817 = vperm.slane %v730, 5
    %v1818 = vlaneseq
    %v1819 = vshrl.u32 %v1818, 7
    %1821 = vset.pattern.permute.xlu0 %v1819
    %1822 = vperm.xlu0 %1821, %v1817
    %v1823 = vpop.permute.xlu0 %1822
    %v1824 = vperm.slane %v730, 6
    %v1825 = vlaneseq
    %v1826 = vshrl.u32 %v1825, 7
    %1828 = vset.pattern.permute.xlu0 %v1826
    %1829 = vperm.xlu0 %1828, %v1824
    %v1830 = vpop.permute.xlu0 %1829
    %v1831 = vperm.slane %v730, 7
    %v1832 = vlaneseq
    %v1833 = vshrl.u32 %v1832, 7
    %1835 = vset.pattern.permute.xlu0 %v1833
    %1836 = vperm.xlu0 %1835, %v1831
    %v1837 = vpop.permute.xlu0 %1836
    %v1838 = vperm.slane %v762, 0
    %v1839 = vlaneseq
    %v1840 = vshrl.u32 %v1839, 7
    %1842 = vset.pattern.permute.xlu0 %v1840
    %1843 = vperm.xlu0 %1842, %v1838
    %v1844 = vpop.permute.xlu0 %1843
    %v1845 = vperm.slane %v762, 1
    %v1846 = vlaneseq
    %v1847 = vshrl.u32 %v1846, 7
    %1849 = vset.pattern.permute.xlu0 %v1847
    %1850 = vperm.xlu0 %1849, %v1845
    %v1851 = vpop.permute.xlu0 %1850
    %v1852 = vperm.slane %v762, 2
    %v1853 = vlaneseq
    %v1854 = vshrl.u32 %v1853, 7
    %1856 = vset.pattern.permute.xlu0 %v1854
    %1857 = vperm.xlu0 %1856, %v1852
    %v1858 = vpop.permute.xlu0 %1857
    %v1859 = vperm.slane %v762, 3
    %v1860 = vlaneseq
    %v1861 = vshrl.u32 %v1860, 7
    %1863 = vset.pattern.permute.xlu0 %v1861
    %1864 = vperm.xlu0 %1863, %v1859
    %v1865 = vpop.permute.xlu0 %1864
    %v1866 = vperm.slane %v762, 4
    %v1867 = vlaneseq
    %v1868 = vshrl.u32 %v1867, 7
    %1870 = vset.pattern.permute.xlu0 %v1868
    %1871 = vperm.xlu0 %1870, %v1866
    %v1872 = vpop.permute.xlu0 %1871
    %v1873 = vperm.slane %v762, 5
    %v1874 = vlaneseq
    %v1875 = vshrl.u32 %v1874, 7
    %1877 = vset.pattern.permute.xlu0 %v1875
    %1878 = vperm.xlu0 %1877, %v1873
    %v1879 = vpop.permute.xlu0 %1878
    %v1880 = vperm.slane %v762, 6
    %v1881 = vlaneseq
    %v1882 = vshrl.u32 %v1881, 7
    %1884 = vset.pattern.permute.xlu0 %v1882
    %1885 = vperm.xlu0 %1884, %v1880
    %v1886 = vpop.permute.xlu0 %1885
    %v1887 = vperm.slane %v762, 7
    %v1888 = vlaneseq
    %v1889 = vshrl.u32 %v1888, 7
    %1891 = vset.pattern.permute.xlu0 %v1889
    %1892 = vperm.xlu0 %1891, %v1887
    %v1893 = vpop.permute.xlu0 %1892
    %v1894 = vperm.slane %v794, 0
    %v1895 = vlaneseq
    %v1896 = vshrl.u32 %v1895, 7
    %1898 = vset.pattern.permute.xlu0 %v1896
    %1899 = vperm.xlu0 %1898, %v1894
    %v1900 = vpop.permute.xlu0 %1899
    %v1901 = vperm.slane %v794, 1
    %v1902 = vlaneseq
    %v1903 = vshrl.u32 %v1902, 7
    %1905 = vset.pattern.permute.xlu0 %v1903
    %1906 = vperm.xlu0 %1905, %v1901
    %v1907 = vpop.permute.xlu0 %1906
    %v1908 = vperm.slane %v794, 2
    %v1909 = vlaneseq
    %v1910 = vshrl.u32 %v1909, 7
    %1912 = vset.pattern.permute.xlu0 %v1910
    %1913 = vperm.xlu0 %1912, %v1908
    %v1914 = vpop.permute.xlu0 %1913
    %v1915 = vperm.slane %v794, 3
    %v1916 = vlaneseq
    %v1917 = vshrl.u32 %v1916, 7
    %1919 = vset.pattern.permute.xlu0 %v1917
    %1920 = vperm.xlu0 %1919, %v1915
    %v1921 = vpop.permute.xlu0 %1920
    %v1922 = vperm.slane %v794, 4
    %v1923 = vlaneseq
    %v1924 = vshrl.u32 %v1923, 7
    %1926 = vset.pattern.permute.xlu0 %v1924
    %1927 = vperm.xlu0 %1926, %v1922
    %v1928 = vpop.permute.xlu0 %1927
    %v1929 = vperm.slane %v794, 5
    %v1930 = vlaneseq
    %v1931 = vshrl.u32 %v1930, 7
    %1933 = vset.pattern.permute.xlu0 %v1931
    %1934 = vperm.xlu0 %1933, %v1929
    %v1935 = vpop.permute.xlu0 %1934
    %v1936 = vperm.slane %v794, 6
    %v1937 = vlaneseq
    %v1938 = vshrl.u32 %v1937, 7
    %1940 = vset.pattern.permute.xlu0 %v1938
    %1941 = vperm.xlu0 %1940, %v1936
    %v1942 = vpop.permute.xlu0 %1941
    %v1943 = vperm.slane %v794, 7
    %v1944 = vlaneseq
    %v1945 = vshrl.u32 %v1944, 7
    %1947 = vset.pattern.permute.xlu0 %v1945
    %1948 = vperm.xlu0 %1947, %v1943
    %v1949 = vpop.permute.xlu0 %1948
    %v1950 = vperm.slane %v826, 0
    %v1951 = vlaneseq
    %v1952 = vshrl.u32 %v1951, 7
    %1954 = vset.pattern.permute.xlu0 %v1952
    %1955 = vperm.xlu0 %1954, %v1950
    %v1956 = vpop.permute.xlu0 %1955
    %v1957 = vperm.slane %v826, 1
    %v1958 = vlaneseq
    %v1959 = vshrl.u32 %v1958, 7
    %1961 = vset.pattern.permute.xlu0 %v1959
    %1962 = vperm.xlu0 %1961, %v1957
    %v1963 = vpop.permute.xlu0 %1962
    %v1964 = vperm.slane %v826, 2
    %v1965 = vlaneseq
    %v1966 = vshrl.u32 %v1965, 7
    %1968 = vset.pattern.permute.xlu0 %v1966
    %1969 = vperm.xlu0 %1968, %v1964
    %v1970 = vpop.permute.xlu0 %1969
    %v1971 = vperm.slane %v826, 3
    %v1972 = vlaneseq
    %v1973 = vshrl.u32 %v1972, 7
    %1975 = vset.pattern.permute.xlu0 %v1973
    %1976 = vperm.xlu0 %1975, %v1971
    %v1977 = vpop.permute.xlu0 %1976
    %v1978 = vperm.slane %v826, 4
    %v1979 = vlaneseq
    %v1980 = vshrl.u32 %v1979, 7
    %1982 = vset.pattern.permute.xlu0 %v1980
    %1983 = vperm.xlu0 %1982, %v1978
    %v1984 = vpop.permute.xlu0 %1983
    %v1985 = vperm.slane %v826, 5
    %v1986 = vlaneseq
    %v1987 = vshrl.u32 %v1986, 7
    %1989 = vset.pattern.permute.xlu0 %v1987
    %1990 = vperm.xlu0 %1989, %v1985
    %v1991 = vpop.permute.xlu0 %1990
    %v1992 = vperm.slane %v826, 6
    %v1993 = vlaneseq
    %v1994 = vshrl.u32 %v1993, 7
    %1996 = vset.pattern.permute.xlu0 %v1994
    %1997 = vperm.xlu0 %1996, %v1992
    %v1998 = vpop.permute.xlu0 %1997
    %v1999 = vperm.slane %v826, 7
    %v2000 = vlaneseq
    %v2001 = vshrl.u32 %v2000, 7
    %2003 = vset.pattern.permute.xlu0 %v2001
    %2004 = vperm.xlu0 %2003, %v1999
    %v2005 = vpop.permute.xlu0 %2004
    %v2010 = vrot.slane %v842, 1
    %v2011 = vrot.slane %v842, 2
    %v2012 = vrot.slane %v842, 3
    %v2013 = vrot.slane %v842, 4
    %v2014 = vrot.slane %v842, 5
    %v2015 = vrot.slane %v842, 6
    %v2016 = vrot.slane %v842, 7
    %v2017 = vrot.slane %v846, 1
    %v2018 = vrot.slane %v846, 2
    %v2019 = vrot.slane %v846, 3
    %v2020 = vrot.slane %v846, 4
    %v2021 = vrot.slane %v846, 5
    %v2022 = vrot.slane %v846, 6
    %v2023 = vrot.slane %v846, 7
    %v2024 = vrot.slane %v850, 1
    %v2025 = vrot.slane %v850, 2
    %v2026 = vrot.slane %v850, 3
    %v2027 = vrot.slane %v850, 4
    %v2028 = vrot.slane %v850, 5
    %v2029 = vrot.slane %v850, 6
    %v2030 = vrot.slane %v850, 7
    %v2031 = vrot.slane %v854, 1
    %v2032 = vrot.slane %v854, 2
    %v2033 = vrot.slane %v854, 3
    %v2034 = vrot.slane %v854, 4
    %v2035 = vrot.slane %v854, 5
    %v2036 = vrot.slane %v854, 6
    %v2037 = vrot.slane %v854, 7
    %v2038 = vperm.slane %v842, 0
    %v2039 = vperm.slane %v2010, 0
    %v2040 = vperm.slane %v2011, 0
    %v2041 = vperm.slane %v2012, 0
    %v2042 = vperm.slane %v2013, 0
    %v2043 = vperm.slane %v2014, 0
    %v2044 = vperm.slane %v2015, 0
    %v2045 = vperm.slane %v2016, 0
    %v2046 = vperm.slane %v846, 0
    %v2047 = vperm.slane %v2017, 0
    %v2048 = vperm.slane %v2018, 0
    %v2049 = vperm.slane %v2019, 0
    %v2050 = vperm.slane %v2020, 0
    %v2051 = vperm.slane %v2021, 0
    %v2052 = vperm.slane %v2022, 0
    %v2053 = vperm.slane %v2023, 0
    %v2054 = vperm.slane %v850, 0
    %v2055 = vperm.slane %v2024, 0
    %v2056 = vperm.slane %v2025, 0
    %v2057 = vperm.slane %v2026, 0
    %v2058 = vperm.slane %v2027, 0
    %v2059 = vperm.slane %v2028, 0
    %v2060 = vperm.slane %v2029, 0
    %v2061 = vperm.slane %v2030, 0
    %v2062 = vperm.slane %v854, 0
    %v2063 = vperm.slane %v2031, 0
    %v2064 = vperm.slane %v2032, 0
    %v2065 = vperm.slane %v2033, 0
    %v2066 = vperm.slane %v2034, 0
    %v2067 = vperm.slane %v2035, 0
    %v2068 = vperm.slane %v2036, 0
    %v2069 = vperm.slane %v2037, 0
    %v2102 = vadd.f32 %v1788, %v2038
    %v2103 = vadd.f32 %v1795, %v2039
    %v2104 = vadd.f32 %v1802, %v2040
    %v2105 = vadd.f32 %v1809, %v2041
    %v2106 = vadd.f32 %v1816, %v2042
    %v2107 = vadd.f32 %v1823, %v2043
    %v2108 = vadd.f32 %v1830, %v2044
    %v2109 = vadd.f32 %v1837, %v2045
    %v2110 = vadd.f32 %v1844, %v2046
    %v2111 = vadd.f32 %v1851, %v2047
    %v2112 = vadd.f32 %v1858, %v2048
    %v2113 = vadd.f32 %v1865, %v2049
    %v2114 = vadd.f32 %v1872, %v2050
    %v2115 = vadd.f32 %v1879, %v2051
    %v2116 = vadd.f32 %v1886, %v2052
    %v2117 = vadd.f32 %v1893, %v2053
    %v2118 = vadd.f32 %v1900, %v2054
    %v2119 = vadd.f32 %v1907, %v2055
    %v2120 = vadd.f32 %v1914, %v2056
    %v2121 = vadd.f32 %v1921, %v2057
    %v2122 = vadd.f32 %v1928, %v2058
    %v2123 = vadd.f32 %v1935, %v2059
    %v2124 = vadd.f32 %v1942, %v2060
    %v2125 = vadd.f32 %v1949, %v2061
    %v2126 = vadd.f32 %v1956, %v2062
    %v2127 = vadd.f32 %v1963, %v2063
    %v2128 = vadd.f32 %v1970, %v2064
    %v2129 = vadd.f32 %v1977, %v2065
    %v2130 = vadd.f32 %v1984, %v2066
    %v2131 = vadd.f32 %v1991, %v2067
    %v2132 = vadd.f32 %v1998, %v2068
    %v2133 = vadd.f32 %v2005, %v2069
    %v2134 = vtanh.pop %v2102
    %v2135 = vtanh.pop %v2103
    %v2136 = vtanh.pop %v2104
    %v2137 = vtanh.pop %v2105
    %v2138 = vtanh.pop %v2106
    %v2139 = vtanh.pop %v2107
    %v2140 = vtanh.pop %v2108
    %v2141 = vtanh.pop %v2109
    %v2142 = vtanh.pop %v2110
    %v2143 = vtanh.pop %v2111
    %v2144 = vtanh.pop %v2112
    %v2145 = vtanh.pop %v2113
    %v2146 = vtanh.pop %v2114
    %v2147 = vtanh.pop %v2115
    %v2148 = vtanh.pop %v2116
    %v2149 = vtanh.pop %v2117
    %v2150 = vtanh.pop %v2118
    %v2151 = vtanh.pop %v2119
    %v2152 = vtanh.pop %v2120
    %v2153 = vtanh.pop %v2121
    %v2154 = vtanh.pop %v2122
    %v2155 = vtanh.pop %v2123
    %v2156 = vtanh.pop %v2124
    %v2157 = vtanh.pop %v2125
    %v2158 = vtanh.pop %v2126
    %v2159 = vtanh.pop %v2127
    %v2160 = vtanh.pop %v2128
    %v2161 = vtanh.pop %v2129
    %v2162 = vtanh.pop %v2130
    %v2163 = vtanh.pop %v2131
    %v2164 = vtanh.pop %v2132
    %v2165 = vtanh.pop %v2133
    %v2166 = vlaneseq
    %v2167 = vshrl.u32 %v2166, 7
    %v2168 = vadd.s32 %v2167, 16
    %2169 = vset.pattern.permute.xlu0 %v2168
    %2170 = vperm.xlu0 %2169, %v1241
    %v2171 = vpop.permute.xlu0 %2170
    %v2172 = vperm.slane %v2171, 0
    %v2173 = vperm.slane %v2171, 1
    %v2174 = vperm.slane %v2171, 2
    %v2175 = vperm.slane %v2171, 3
    %v2176 = vperm.slane %v2171, 4
    %v2177 = vperm.slane %v2171, 5
    %v2178 = vperm.slane %v2171, 6
    %v2179 = vperm.slane %v2171, 7
    %v2180 = vmul.f32 %v2134, %v2172
    %v2181 = vmul.f32 %v2135, %v2173
    %v2182 = vmul.f32 %v2136, %v2174
    %v2183 = vmul.f32 %v2137, %v2175
    %v2184 = vmul.f32 %v2138, %v2176
    %v2185 = vmul.f32 %v2139, %v2177
    %v2186 = vmul.f32 %v2140, %v2178
    %v2187 = vmul.f32 %v2141, %v2179
    %v2188 = vmul.f32 %v2142, %v2172
    %v2189 = vmul.f32 %v2143, %v2173
    %v2190 = vmul.f32 %v2144, %v2174
    %v2191 = vmul.f32 %v2145, %v2175
    %v2192 = vmul.f32 %v2146, %v2176
    %v2193 = vmul.f32 %v2147, %v2177
    %v2194 = vmul.f32 %v2148, %v2178
    %v2195 = vmul.f32 %v2149, %v2179
    %v2196 = vmul.f32 %v2150, %v2172
    %v2197 = vmul.f32 %v2151, %v2173
    %v2198 = vmul.f32 %v2152, %v2174
    %v2199 = vmul.f32 %v2153, %v2175
    %v2200 = vmul.f32 %v2154, %v2176
    %v2201 = vmul.f32 %v2155, %v2177
    %v2202 = vmul.f32 %v2156, %v2178
    %v2203 = vmul.f32 %v2157, %v2179
    %v2204 = vmul.f32 %v2158, %v2172
    %v2205 = vmul.f32 %v2159, %v2173
    %v2206 = vmul.f32 %v2160, %v2174
    %v2207 = vmul.f32 %v2161, %v2175
    %v2208 = vmul.f32 %v2162, %v2176
    %v2209 = vmul.f32 %v2163, %v2177
    %v2210 = vmul.f32 %v2164, %v2178
    %v2211 = vmul.f32 %v2165, %v2179
    %v2212 = vadd.f32 %v2180, %v2181
    %v2213 = vadd.f32 %v2212, %v2182
    %v2214 = vadd.f32 %v2213, %v2183
    %v2215 = vadd.f32 %v2214, %v2184
    %v2216 = vadd.f32 %v2215, %v2185
    %v2217 = vadd.f32 %v2216, %v2186
    %v2218 = vadd.f32 %v2217, %v2187
    %v2219 = vadd.f32 %v2188, %v2189
    %v2220 = vadd.f32 %v2219, %v2190
    %v2221 = vadd.f32 %v2220, %v2191
    %v2222 = vadd.f32 %v2221, %v2192
    %v2223 = vadd.f32 %v2222, %v2193
    %v2224 = vadd.f32 %v2223, %v2194
    %v2225 = vadd.f32 %v2224, %v2195
    %v2226 = vadd.f32 %v2196, %v2197
    %v2227 = vadd.f32 %v2226, %v2198
    %v2228 = vadd.f32 %v2227, %v2199
    %v2229 = vadd.f32 %v2228, %v2200
    %v2230 = vadd.f32 %v2229, %v2201
    %v2231 = vadd.f32 %v2230, %v2202
    %v2232 = vadd.f32 %v2231, %v2203
    %v2233 = vadd.f32 %v2204, %v2205
    %v2234 = vadd.f32 %v2233, %v2206
    %v2235 = vadd.f32 %v2234, %v2207
    %v2236 = vadd.f32 %v2235, %v2208
    %v2237 = vadd.f32 %v2236, %v2209
    %v2238 = vadd.f32 %v2237, %v2210
    %v2239 = vadd.f32 %v2238, %v2211
    %v2240 = vadd.f32 %v1778, %v2218
    %v2241 = vadd.f32 %v1779, %v2225
    %v2242 = vadd.f32 %v1780, %v2232
    %v2243 = vadd.f32 %v1781, %v2239
    %v2244 = vperm.slane %v731, 0
    %v2245 = vlaneseq
    %v2246 = vshrl.u32 %v2245, 7
    %2248 = vset.pattern.permute.xlu0 %v2246
    %2249 = vperm.xlu0 %2248, %v2244
    %v2250 = vpop.permute.xlu0 %2249
    %v2251 = vperm.slane %v731, 1
    %v2252 = vlaneseq
    %v2253 = vshrl.u32 %v2252, 7
    %2255 = vset.pattern.permute.xlu0 %v2253
    %2256 = vperm.xlu0 %2255, %v2251
    %v2257 = vpop.permute.xlu0 %2256
    %v2258 = vperm.slane %v731, 2
    %v2259 = vlaneseq
    %v2260 = vshrl.u32 %v2259, 7
    %2262 = vset.pattern.permute.xlu0 %v2260
    %2263 = vperm.xlu0 %2262, %v2258
    %v2264 = vpop.permute.xlu0 %2263
    %v2265 = vperm.slane %v731, 3
    %v2266 = vlaneseq
    %v2267 = vshrl.u32 %v2266, 7
    %2269 = vset.pattern.permute.xlu0 %v2267
    %2270 = vperm.xlu0 %2269, %v2265
    %v2271 = vpop.permute.xlu0 %2270
    %v2272 = vperm.slane %v731, 4
    %v2273 = vlaneseq
    %v2274 = vshrl.u32 %v2273, 7
    %2276 = vset.pattern.permute.xlu0 %v2274
    %2277 = vperm.xlu0 %2276, %v2272
    %v2278 = vpop.permute.xlu0 %2277
    %v2279 = vperm.slane %v731, 5
    %v2280 = vlaneseq
    %v2281 = vshrl.u32 %v2280, 7
    %2283 = vset.pattern.permute.xlu0 %v2281
    %2284 = vperm.xlu0 %2283, %v2279
    %v2285 = vpop.permute.xlu0 %2284
    %v2286 = vperm.slane %v731, 6
    %v2287 = vlaneseq
    %v2288 = vshrl.u32 %v2287, 7
    %2290 = vset.pattern.permute.xlu0 %v2288
    %2291 = vperm.xlu0 %2290, %v2286
    %v2292 = vpop.permute.xlu0 %2291
    %v2293 = vperm.slane %v731, 7
    %v2294 = vlaneseq
    %v2295 = vshrl.u32 %v2294, 7
    %2297 = vset.pattern.permute.xlu0 %v2295
    %2298 = vperm.xlu0 %2297, %v2293
    %v2299 = vpop.permute.xlu0 %2298
    %v2300 = vperm.slane %v763, 0
    %v2301 = vlaneseq
    %v2302 = vshrl.u32 %v2301, 7
    %2304 = vset.pattern.permute.xlu0 %v2302
    %2305 = vperm.xlu0 %2304, %v2300
    %v2306 = vpop.permute.xlu0 %2305
    %v2307 = vperm.slane %v763, 1
    %v2308 = vlaneseq
    %v2309 = vshrl.u32 %v2308, 7
    %2311 = vset.pattern.permute.xlu0 %v2309
    %2312 = vperm.xlu0 %2311, %v2307
    %v2313 = vpop.permute.xlu0 %2312
    %v2314 = vperm.slane %v763, 2
    %v2315 = vlaneseq
    %v2316 = vshrl.u32 %v2315, 7
    %2318 = vset.pattern.permute.xlu0 %v2316
    %2319 = vperm.xlu0 %2318, %v2314
    %v2320 = vpop.permute.xlu0 %2319
    %v2321 = vperm.slane %v763, 3
    %v2322 = vlaneseq
    %v2323 = vshrl.u32 %v2322, 7
    %2325 = vset.pattern.permute.xlu0 %v2323
    %2326 = vperm.xlu0 %2325, %v2321
    %v2327 = vpop.permute.xlu0 %2326
    %v2328 = vperm.slane %v763, 4
    %v2329 = vlaneseq
    %v2330 = vshrl.u32 %v2329, 7
    %2332 = vset.pattern.permute.xlu0 %v2330
    %2333 = vperm.xlu0 %2332, %v2328
    %v2334 = vpop.permute.xlu0 %2333
    %v2335 = vperm.slane %v763, 5
    %v2336 = vlaneseq
    %v2337 = vshrl.u32 %v2336, 7
    %2339 = vset.pattern.permute.xlu0 %v2337
    %2340 = vperm.xlu0 %2339, %v2335
    %v2341 = vpop.permute.xlu0 %2340
    %v2342 = vperm.slane %v763, 6
    %v2343 = vlaneseq
    %v2344 = vshrl.u32 %v2343, 7
    %2346 = vset.pattern.permute.xlu0 %v2344
    %2347 = vperm.xlu0 %2346, %v2342
    %v2348 = vpop.permute.xlu0 %2347
    %v2349 = vperm.slane %v763, 7
    %v2350 = vlaneseq
    %v2351 = vshrl.u32 %v2350, 7
    %2353 = vset.pattern.permute.xlu0 %v2351
    %2354 = vperm.xlu0 %2353, %v2349
    %v2355 = vpop.permute.xlu0 %2354
    %v2356 = vperm.slane %v795, 0
    %v2357 = vlaneseq
    %v2358 = vshrl.u32 %v2357, 7
    %2360 = vset.pattern.permute.xlu0 %v2358
    %2361 = vperm.xlu0 %2360, %v2356
    %v2362 = vpop.permute.xlu0 %2361
    %v2363 = vperm.slane %v795, 1
    %v2364 = vlaneseq
    %v2365 = vshrl.u32 %v2364, 7
    %2367 = vset.pattern.permute.xlu0 %v2365
    %2368 = vperm.xlu0 %2367, %v2363
    %v2369 = vpop.permute.xlu0 %2368
    %v2370 = vperm.slane %v795, 2
    %v2371 = vlaneseq
    %v2372 = vshrl.u32 %v2371, 7
    %2374 = vset.pattern.permute.xlu0 %v2372
    %2375 = vperm.xlu0 %2374, %v2370
    %v2376 = vpop.permute.xlu0 %2375
    %v2377 = vperm.slane %v795, 3
    %v2378 = vlaneseq
    %v2379 = vshrl.u32 %v2378, 7
    %2381 = vset.pattern.permute.xlu0 %v2379
    %2382 = vperm.xlu0 %2381, %v2377
    %v2383 = vpop.permute.xlu0 %2382
    %v2384 = vperm.slane %v795, 4
    %v2385 = vlaneseq
    %v2386 = vshrl.u32 %v2385, 7
    %2388 = vset.pattern.permute.xlu0 %v2386
    %2389 = vperm.xlu0 %2388, %v2384
    %v2390 = vpop.permute.xlu0 %2389
    %v2391 = vperm.slane %v795, 5
    %v2392 = vlaneseq
    %v2393 = vshrl.u32 %v2392, 7
    %2395 = vset.pattern.permute.xlu0 %v2393
    %2396 = vperm.xlu0 %2395, %v2391
    %v2397 = vpop.permute.xlu0 %2396
    %v2398 = vperm.slane %v795, 6
    %v2399 = vlaneseq
    %v2400 = vshrl.u32 %v2399, 7
    %2402 = vset.pattern.permute.xlu0 %v2400
    %2403 = vperm.xlu0 %2402, %v2398
    %v2404 = vpop.permute.xlu0 %2403
    %v2405 = vperm.slane %v795, 7
    %v2406 = vlaneseq
    %v2407 = vshrl.u32 %v2406, 7
    %2409 = vset.pattern.permute.xlu0 %v2407
    %2410 = vperm.xlu0 %2409, %v2405
    %v2411 = vpop.permute.xlu0 %2410
    %v2412 = vperm.slane %v827, 0
    %v2413 = vlaneseq
    %v2414 = vshrl.u32 %v2413, 7
    %2416 = vset.pattern.permute.xlu0 %v2414
    %2417 = vperm.xlu0 %2416, %v2412
    %v2418 = vpop.permute.xlu0 %2417
    %v2419 = vperm.slane %v827, 1
    %v2420 = vlaneseq
    %v2421 = vshrl.u32 %v2420, 7
    %2423 = vset.pattern.permute.xlu0 %v2421
    %2424 = vperm.xlu0 %2423, %v2419
    %v2425 = vpop.permute.xlu0 %2424
    %v2426 = vperm.slane %v827, 2
    %v2427 = vlaneseq
    %v2428 = vshrl.u32 %v2427, 7
    %2430 = vset.pattern.permute.xlu0 %v2428
    %2431 = vperm.xlu0 %2430, %v2426
    %v2432 = vpop.permute.xlu0 %2431
    %v2433 = vperm.slane %v827, 3
    %v2434 = vlaneseq
    %v2435 = vshrl.u32 %v2434, 7
    %2437 = vset.pattern.permute.xlu0 %v2435
    %2438 = vperm.xlu0 %2437, %v2433
    %v2439 = vpop.permute.xlu0 %2438
    %v2440 = vperm.slane %v827, 4
    %v2441 = vlaneseq
    %v2442 = vshrl.u32 %v2441, 7
    %2444 = vset.pattern.permute.xlu0 %v2442
    %2445 = vperm.xlu0 %2444, %v2440
    %v2446 = vpop.permute.xlu0 %2445
    %v2447 = vperm.slane %v827, 5
    %v2448 = vlaneseq
    %v2449 = vshrl.u32 %v2448, 7
    %2451 = vset.pattern.permute.xlu0 %v2449
    %2452 = vperm.xlu0 %2451, %v2447
    %v2453 = vpop.permute.xlu0 %2452
    %v2454 = vperm.slane %v827, 6
    %v2455 = vlaneseq
    %v2456 = vshrl.u32 %v2455, 7
    %2458 = vset.pattern.permute.xlu0 %v2456
    %2459 = vperm.xlu0 %2458, %v2454
    %v2460 = vpop.permute.xlu0 %2459
    %v2461 = vperm.slane %v827, 7
    %v2462 = vlaneseq
    %v2463 = vshrl.u32 %v2462, 7
    %2465 = vset.pattern.permute.xlu0 %v2463
    %2466 = vperm.xlu0 %2465, %v2461
    %v2467 = vpop.permute.xlu0 %2466
    %v2472 = vrot.slane %v843, 1
    %v2473 = vrot.slane %v843, 2
    %v2474 = vrot.slane %v843, 3
    %v2475 = vrot.slane %v843, 4
    %v2476 = vrot.slane %v843, 5
    %v2477 = vrot.slane %v843, 6
    %v2478 = vrot.slane %v843, 7
    %v2479 = vrot.slane %v847, 1
    %v2480 = vrot.slane %v847, 2
    %v2481 = vrot.slane %v847, 3
    %v2482 = vrot.slane %v847, 4
    %v2483 = vrot.slane %v847, 5
    %v2484 = vrot.slane %v847, 6
    %v2485 = vrot.slane %v847, 7
    %v2486 = vrot.slane %v851, 1
    %v2487 = vrot.slane %v851, 2
    %v2488 = vrot.slane %v851, 3
    %v2489 = vrot.slane %v851, 4
    %v2490 = vrot.slane %v851, 5
    %v2491 = vrot.slane %v851, 6
    %v2492 = vrot.slane %v851, 7
    %v2493 = vrot.slane %v855, 1
    %v2494 = vrot.slane %v855, 2
    %v2495 = vrot.slane %v855, 3
    %v2496 = vrot.slane %v855, 4
    %v2497 = vrot.slane %v855, 5
    %v2498 = vrot.slane %v855, 6
    %v2499 = vrot.slane %v855, 7
    %v2500 = vperm.slane %v843, 0
    %v2501 = vperm.slane %v2472, 0
    %v2502 = vperm.slane %v2473, 0
    %v2503 = vperm.slane %v2474, 0
    %v2504 = vperm.slane %v2475, 0
    %v2505 = vperm.slane %v2476, 0
    %v2506 = vperm.slane %v2477, 0
    %v2507 = vperm.slane %v2478, 0
    %v2508 = vperm.slane %v847, 0
    %v2509 = vperm.slane %v2479, 0
    %v2510 = vperm.slane %v2480, 0
    %v2511 = vperm.slane %v2481, 0
    %v2512 = vperm.slane %v2482, 0
    %v2513 = vperm.slane %v2483, 0
    %v2514 = vperm.slane %v2484, 0
    %v2515 = vperm.slane %v2485, 0
    %v2516 = vperm.slane %v851, 0
    %v2517 = vperm.slane %v2486, 0
    %v2518 = vperm.slane %v2487, 0
    %v2519 = vperm.slane %v2488, 0
    %v2520 = vperm.slane %v2489, 0
    %v2521 = vperm.slane %v2490, 0
    %v2522 = vperm.slane %v2491, 0
    %v2523 = vperm.slane %v2492, 0
    %v2524 = vperm.slane %v855, 0
    %v2525 = vperm.slane %v2493, 0
    %v2526 = vperm.slane %v2494, 0
    %v2527 = vperm.slane %v2495, 0
    %v2528 = vperm.slane %v2496, 0
    %v2529 = vperm.slane %v2497, 0
    %v2530 = vperm.slane %v2498, 0
    %v2531 = vperm.slane %v2499, 0
    %v2564 = vadd.f32 %v2250, %v2500
    %v2565 = vadd.f32 %v2257, %v2501
    %v2566 = vadd.f32 %v2264, %v2502
    %v2567 = vadd.f32 %v2271, %v2503
    %v2568 = vadd.f32 %v2278, %v2504
    %v2569 = vadd.f32 %v2285, %v2505
    %v2570 = vadd.f32 %v2292, %v2506
    %v2571 = vadd.f32 %v2299, %v2507
    %v2572 = vadd.f32 %v2306, %v2508
    %v2573 = vadd.f32 %v2313, %v2509
    %v2574 = vadd.f32 %v2320, %v2510
    %v2575 = vadd.f32 %v2327, %v2511
    %v2576 = vadd.f32 %v2334, %v2512
    %v2577 = vadd.f32 %v2341, %v2513
    %v2578 = vadd.f32 %v2348, %v2514
    %v2579 = vadd.f32 %v2355, %v2515
    %v2580 = vadd.f32 %v2362, %v2516
    %v2581 = vadd.f32 %v2369, %v2517
    %v2582 = vadd.f32 %v2376, %v2518
    %v2583 = vadd.f32 %v2383, %v2519
    %v2584 = vadd.f32 %v2390, %v2520
    %v2585 = vadd.f32 %v2397, %v2521
    %v2586 = vadd.f32 %v2404, %v2522
    %v2587 = vadd.f32 %v2411, %v2523
    %v2588 = vadd.f32 %v2418, %v2524
    %v2589 = vadd.f32 %v2425, %v2525
    %v2590 = vadd.f32 %v2432, %v2526
    %v2591 = vadd.f32 %v2439, %v2527
    %v2592 = vadd.f32 %v2446, %v2528
    %v2593 = vadd.f32 %v2453, %v2529
    %v2594 = vadd.f32 %v2460, %v2530
    %v2595 = vadd.f32 %v2467, %v2531
    %v2596 = vtanh.pop %v2564
    %v2597 = vtanh.pop %v2565
    %v2598 = vtanh.pop %v2566
    %v2599 = vtanh.pop %v2567
    %v2600 = vtanh.pop %v2568
    %v2601 = vtanh.pop %v2569
    %v2602 = vtanh.pop %v2570
    %v2603 = vtanh.pop %v2571
    %v2604 = vtanh.pop %v2572
    %v2605 = vtanh.pop %v2573
    %v2606 = vtanh.pop %v2574
    %v2607 = vtanh.pop %v2575
    %v2608 = vtanh.pop %v2576
    %v2609 = vtanh.pop %v2577
    %v2610 = vtanh.pop %v2578
    %v2611 = vtanh.pop %v2579
    %v2612 = vtanh.pop %v2580
    %v2613 = vtanh.pop %v2581
    %v2614 = vtanh.pop %v2582
    %v2615 = vtanh.pop %v2583
    %v2616 = vtanh.pop %v2584
    %v2617 = vtanh.pop %v2585
    %v2618 = vtanh.pop %v2586
    %v2619 = vtanh.pop %v2587
    %v2620 = vtanh.pop %v2588
    %v2621 = vtanh.pop %v2589
    %v2622 = vtanh.pop %v2590
    %v2623 = vtanh.pop %v2591
    %v2624 = vtanh.pop %v2592
    %v2625 = vtanh.pop %v2593
    %v2626 = vtanh.pop %v2594
    %v2627 = vtanh.pop %v2595
    %v2628 = vlaneseq
    %v2629 = vshrl.u32 %v2628, 7
    %v2630 = vadd.s32 %v2629, 24
    %2631 = vset.pattern.permute.xlu0 %v2630
    %2632 = vperm.xlu0 %2631, %v1241
    %v2633 = vpop.permute.xlu0 %2632
    %v2634 = vperm.slane %v2633, 0
    %v2635 = vperm.slane %v2633, 1
    %v2636 = vperm.slane %v2633, 2
    %v2637 = vperm.slane %v2633, 3
    %v2638 = vperm.slane %v2633, 4
    %v2639 = vperm.slane %v2633, 5
    %v2640 = vperm.slane %v2633, 6
    %v2641 = vperm.slane %v2633, 7
    %v2642 = vmul.f32 %v2596, %v2634
    %v2643 = vmul.f32 %v2597, %v2635
    %v2644 = vmul.f32 %v2598, %v2636
    %v2645 = vmul.f32 %v2599, %v2637
    %v2646 = vmul.f32 %v2600, %v2638
    %v2647 = vmul.f32 %v2601, %v2639
    %v2648 = vmul.f32 %v2602, %v2640
    %v2649 = vmul.f32 %v2603, %v2641
    %v2650 = vmul.f32 %v2604, %v2634
    %v2651 = vmul.f32 %v2605, %v2635
    %v2652 = vmul.f32 %v2606, %v2636
    %v2653 = vmul.f32 %v2607, %v2637
    %v2654 = vmul.f32 %v2608, %v2638
    %v2655 = vmul.f32 %v2609, %v2639
    %v2656 = vmul.f32 %v2610, %v2640
    %v2657 = vmul.f32 %v2611, %v2641
    %v2658 = vmul.f32 %v2612, %v2634
    %v2659 = vmul.f32 %v2613, %v2635
    %v2660 = vmul.f32 %v2614, %v2636
    %v2661 = vmul.f32 %v2615, %v2637
    %v2662 = vmul.f32 %v2616, %v2638
    %v2663 = vmul.f32 %v2617, %v2639
    %v2664 = vmul.f32 %v2618, %v2640
    %v2665 = vmul.f32 %v2619, %v2641
    %v2666 = vmul.f32 %v2620, %v2634
    %v2667 = vmul.f32 %v2621, %v2635
    %v2668 = vmul.f32 %v2622, %v2636
    %v2669 = vmul.f32 %v2623, %v2637
    %v2670 = vmul.f32 %v2624, %v2638
    %v2671 = vmul.f32 %v2625, %v2639
    %v2672 = vmul.f32 %v2626, %v2640
    %v2673 = vmul.f32 %v2627, %v2641
    %v2674 = vadd.f32 %v2642, %v2643
    %v2675 = vadd.f32 %v2674, %v2644
    %v2676 = vadd.f32 %v2675, %v2645
    %v2677 = vadd.f32 %v2676, %v2646
    %v2678 = vadd.f32 %v2677, %v2647
    %v2679 = vadd.f32 %v2678, %v2648
    %v2680 = vadd.f32 %v2679, %v2649
    %v2681 = vadd.f32 %v2650, %v2651
    %v2682 = vadd.f32 %v2681, %v2652
    %v2683 = vadd.f32 %v2682, %v2653
    %v2684 = vadd.f32 %v2683, %v2654
    %v2685 = vadd.f32 %v2684, %v2655
    %v2686 = vadd.f32 %v2685, %v2656
    %v2687 = vadd.f32 %v2686, %v2657
    %v2688 = vadd.f32 %v2658, %v2659
    %v2689 = vadd.f32 %v2688, %v2660
    %v2690 = vadd.f32 %v2689, %v2661
    %v2691 = vadd.f32 %v2690, %v2662
    %v2692 = vadd.f32 %v2691, %v2663
    %v2693 = vadd.f32 %v2692, %v2664
    %v2694 = vadd.f32 %v2693, %v2665
    %v2695 = vadd.f32 %v2666, %v2667
    %v2696 = vadd.f32 %v2695, %v2668
    %v2697 = vadd.f32 %v2696, %v2669
    %v2698 = vadd.f32 %v2697, %v2670
    %v2699 = vadd.f32 %v2698, %v2671
    %v2700 = vadd.f32 %v2699, %v2672
    %v2701 = vadd.f32 %v2700, %v2673
    %v2702 = vadd.f32 %v2240, %v2680
    %v2703 = vadd.f32 %v2241, %v2687
    %v2704 = vadd.f32 %v2242, %v2694
    %v2705 = vadd.f32 %v2243, %v2701
    %v2706 = vld [vmem:[%s0] sm:$0xf]
    %v2707 = vperm.slane %v2706, 0
    %v2708 = vlaneseq
    %v2709 = vshrl.u32 %v2708, 7
    %2711 = vset.pattern.permute.xlu0 %v2709
    %2712 = vperm.xlu0 %2711, %v2707
    %v2713 = vpop.permute.xlu0 %2712
    %v2714 = vperm.slane %v2706, 1
    %v2715 = vlaneseq
    %v2716 = vshrl.u32 %v2715, 7
    %2718 = vset.pattern.permute.xlu0 %v2716
    %2719 = vperm.xlu0 %2718, %v2714
    %v2720 = vpop.permute.xlu0 %2719
    %v2721 = vperm.slane %v2706, 2
    %v2722 = vlaneseq
    %v2723 = vshrl.u32 %v2722, 7
    %2725 = vset.pattern.permute.xlu0 %v2723
    %2726 = vperm.xlu0 %2725, %v2721
    %v2727 = vpop.permute.xlu0 %2726
    %v2728 = vperm.slane %v2706, 3
    %v2729 = vlaneseq
    %v2730 = vshrl.u32 %v2729, 7
    %2732 = vset.pattern.permute.xlu0 %v2730
    %2733 = vperm.xlu0 %2732, %v2728
    %v2734 = vpop.permute.xlu0 %2733
    %v2735 = vlaneseq
    %v2736 = vand.u32 %v2735, 127
    %vm2737 = vcmp.lt.s32.totalorder %v2736, %v2713
    %vm2738 = vcmp.lt.s32.totalorder %v2736, %v2720
    %vm2739 = vcmp.lt.s32.totalorder %v2736, %v2727
    %vm2740 = vcmp.lt.s32.totalorder %v2736, %v2734
    %v2741 = vsel %vm2737, %v2702, -1000000.0
    %v2742 = vsel %vm2738, %v2703, -1000000.0
    %v2743 = vsel %vm2739, %v2704, -1000000.0
    %v2744 = vsel %vm2740, %v2705, -1000000.0
    %2745 = vmax.xlane.f32.xlu0 %v2741
    %v2746 = vpop.xlane.xlu0 %2745
    %2747 = vmax.xlane.f32.xlu0 %v2742
    %v2748 = vpop.xlane.xlu0 %2747
    %2749 = vmax.xlane.f32.xlu0 %v2743
    %v2750 = vpop.xlane.xlu0 %2749
    %2751 = vmax.xlane.f32.xlu0 %v2744
    %v2752 = vpop.xlane.xlu0 %2751
    %v2753 = vsub.f32 %v2741, %v2746
    %v2754 = vsub.f32 %v2742, %v2748
    %v2755 = vsub.f32 %v2743, %v2750
    %v2756 = vsub.f32 %v2744, %v2752
    %v2757 = vmul.f32 %v2753, 1.442695
    %v2758 = vpow.pop %v2757
    %v2759 = vmul.f32 %v2754, 1.442695
    %v2760 = vpow.pop %v2759
    %v2761 = vmul.f32 %v2755, 1.442695
    %v2762 = vpow.pop %v2761
    %v2763 = vmul.f32 %v2756, 1.442695
    %v2764 = vpow.pop %v2763
    %2765 = vadd.xlane.f32.xlu0 %v2758
    %v2766 = vpop.xlane.xlu0 %2765
    %2767 = vadd.xlane.f32.xlu0 %v2760
    %v2768 = vpop.xlane.xlu0 %2767
    %2769 = vadd.xlane.f32.xlu0 %v2762
    %v2770 = vpop.xlane.xlu0 %2769
    %2771 = vadd.xlane.f32.xlu0 %v2764
    %v2772 = vpop.xlane.xlu0 %2771
    %v2773 = vld [vmem:[%s3] sm:$0xff]
    %v2774 = vld [vmem:[%s3 + $0x8] sm:$0xff]
    %v2775 = vld [vmem:[%s3 + $0x10] sm:$0xff]
    %v2776 = vld [vmem:[%s3 + $0x18] sm:$0xff]
    %v2777 = vld [vmem:[%s3 + $0x20] sm:$0xff]
    %v2778 = vld [vmem:[%s3 + $0x28] sm:$0xff]
    %v2779 = vld [vmem:[%s3 + $0x30] sm:$0xff]
    %v2780 = vld [vmem:[%s3 + $0x38] sm:$0xff]
    %v2781 = vld [vmem:[%s3 + $0x40] sm:$0xff]
    %v2782 = vld [vmem:[%s3 + $0x48] sm:$0xff]
    %v2783 = vld [vmem:[%s3 + $0x50] sm:$0xff]
    %v2784 = vld [vmem:[%s3 + $0x58] sm:$0xff]
    %v2785 = vld [vmem:[%s3 + $0x60] sm:$0xff]
    %v2786 = vld [vmem:[%s3 + $0x68] sm:$0xff]
    %v2787 = vld [vmem:[%s3 + $0x70] sm:$0xff]
    %v2788 = vld [vmem:[%s3 + $0x78] sm:$0xff]
    %v2789 = vld [vmem:[%s3 + $0x80] sm:$0xff]
    %v2790 = vld [vmem:[%s3 + $0x88] sm:$0xff]
    %v2791 = vld [vmem:[%s3 + $0x90] sm:$0xff]
    %v2792 = vld [vmem:[%s3 + $0x98] sm:$0xff]
    %v2793 = vld [vmem:[%s3 + $0xa0] sm:$0xff]
    %v2794 = vld [vmem:[%s3 + $0xa8] sm:$0xff]
    %v2795 = vld [vmem:[%s3 + $0xb0] sm:$0xff]
    %v2796 = vld [vmem:[%s3 + $0xb8] sm:$0xff]
    %v2797 = vld [vmem:[%s3 + $0xc0] sm:$0xff]
    %v2798 = vld [vmem:[%s3 + $0xc8] sm:$0xff]
    %v2799 = vld [vmem:[%s3 + $0xd0] sm:$0xff]
    %v2800 = vld [vmem:[%s3 + $0xd8] sm:$0xff]
    %v2801 = vld [vmem:[%s3 + $0xe0] sm:$0xff]
    %v2802 = vld [vmem:[%s3 + $0xe8] sm:$0xff]
    %v2803 = vld [vmem:[%s3 + $0xf0] sm:$0xff]
    %v2804 = vld [vmem:[%s3 + $0xf8] sm:$0xff]
    %v2805 = vld [vmem:[%s3 + $0x100] sm:$0xff]
    %v2806 = vld [vmem:[%s3 + $0x108] sm:$0xff]
    %v2807 = vld [vmem:[%s3 + $0x110] sm:$0xff]
    %v2808 = vld [vmem:[%s3 + $0x118] sm:$0xff]
    %v2809 = vld [vmem:[%s3 + $0x120] sm:$0xff]
    %v2810 = vld [vmem:[%s3 + $0x128] sm:$0xff]
    %v2811 = vld [vmem:[%s3 + $0x130] sm:$0xff]
    %v2812 = vld [vmem:[%s3 + $0x138] sm:$0xff]
    %v2813 = vld [vmem:[%s3 + $0x140] sm:$0xff]
    %v2814 = vld [vmem:[%s3 + $0x148] sm:$0xff]
    %v2815 = vld [vmem:[%s3 + $0x150] sm:$0xff]
    %v2816 = vld [vmem:[%s3 + $0x158] sm:$0xff]
    %v2817 = vld [vmem:[%s3 + $0x160] sm:$0xff]
    %v2818 = vld [vmem:[%s3 + $0x168] sm:$0xff]
    %v2819 = vld [vmem:[%s3 + $0x170] sm:$0xff]
    %v2820 = vld [vmem:[%s3 + $0x178] sm:$0xff]
    %v2821 = vld [vmem:[%s3 + $0x180] sm:$0xff]
    %v2822 = vld [vmem:[%s3 + $0x188] sm:$0xff]
    %v2823 = vld [vmem:[%s3 + $0x190] sm:$0xff]
    %v2824 = vld [vmem:[%s3 + $0x198] sm:$0xff]
    %v2825 = vld [vmem:[%s3 + $0x1a0] sm:$0xff]
    %v2826 = vld [vmem:[%s3 + $0x1a8] sm:$0xff]
    %v2827 = vld [vmem:[%s3 + $0x1b0] sm:$0xff]
    %v2828 = vld [vmem:[%s3 + $0x1b8] sm:$0xff]
    %v2829 = vld [vmem:[%s3 + $0x1c0] sm:$0xff]
    %v2830 = vld [vmem:[%s3 + $0x1c8] sm:$0xff]
    %v2831 = vld [vmem:[%s3 + $0x1d0] sm:$0xff]
    %v2832 = vld [vmem:[%s3 + $0x1d8] sm:$0xff]
    %v2833 = vld [vmem:[%s3 + $0x1e0] sm:$0xff]
    %v2834 = vld [vmem:[%s3 + $0x1e8] sm:$0xff]
    %v2835 = vld [vmem:[%s3 + $0x1f0] sm:$0xff]
    %v2836 = vld [vmem:[%s3 + $0x1f8] sm:$0xff]
    %2837 = vmatpush.msra.mxu0 %v2788
    %2838 = vmatpush.msra.mxu0 %v2787
    %2839 = vmatpush.msra.mxu0 %v2786
    %2840 = vmatpush.msra.mxu0 %v2785
    %2841 = vmatpush.msra.mxu0 %v2784
    %2842 = vmatpush.msra.mxu0 %v2783
    %2843 = vmatpush.msra.mxu0 %v2782
    %2844 = vmatpush.msra.mxu0 %v2781
    %2845 = vmatpush.msra.mxu0 %v2780
    %2846 = vmatpush.msra.mxu0 %v2779
    %2847 = vmatpush.msra.mxu0 %v2778
    %2848 = vmatpush.msra.mxu0 %v2777
    %2849 = vmatpush.msra.mxu0 %v2776
    %2850 = vmatpush.msra.mxu0 %v2775
    %2851 = vmatpush.msra.mxu0 %v2774
    %2852 = vmatpush.msra.mxu0 %v2773
    %2853 = vmatmul.f32.gmra.mxu0 %v2758
    %v2854 = vpop.f32.mrf.mxu0
    %v2855 = vadd.f32 0.0, %v2854
    %2856 = vdwg.mxu0
    %2857 = vmatpush.msra.mxu0 %v2804
    %2858 = vmatpush.msra.mxu0 %v2803
    %2859 = vmatpush.msra.mxu0 %v2802
    %2860 = vmatpush.msra.mxu0 %v2801
    %2861 = vmatpush.msra.mxu0 %v2800
    %2862 = vmatpush.msra.mxu0 %v2799
    %2863 = vmatpush.msra.mxu0 %v2798
    %2864 = vmatpush.msra.mxu0 %v2797
    %2865 = vmatpush.msra.mxu0 %v2796
    %2866 = vmatpush.msra.mxu0 %v2795
    %2867 = vmatpush.msra.mxu0 %v2794
    %2868 = vmatpush.msra.mxu0 %v2793
    %2869 = vmatpush.msra.mxu0 %v2792
    %2870 = vmatpush.msra.mxu0 %v2791
    %2871 = vmatpush.msra.mxu0 %v2790
    %2872 = vmatpush.msra.mxu0 %v2789
    %2873 = vmatmul.f32.gmra.mxu0 %v2760
    %v2874 = vpop.f32.mrf.mxu0
    %v2875 = vadd.f32 0.0, %v2874
    %2876 = vdwg.mxu0
    %2877 = vmatpush.msra.mxu0 %v2820
    %2878 = vmatpush.msra.mxu0 %v2819
    %2879 = vmatpush.msra.mxu0 %v2818
    %2880 = vmatpush.msra.mxu0 %v2817
    %2881 = vmatpush.msra.mxu0 %v2816
    %2882 = vmatpush.msra.mxu0 %v2815
    %2883 = vmatpush.msra.mxu0 %v2814
    %2884 = vmatpush.msra.mxu0 %v2813
    %2885 = vmatpush.msra.mxu0 %v2812
    %2886 = vmatpush.msra.mxu0 %v2811
    %2887 = vmatpush.msra.mxu0 %v2810
    %2888 = vmatpush.msra.mxu0 %v2809
    %2889 = vmatpush.msra.mxu0 %v2808
    %2890 = vmatpush.msra.mxu0 %v2807
    %2891 = vmatpush.msra.mxu0 %v2806
    %2892 = vmatpush.msra.mxu0 %v2805
    %2893 = vmatmul.f32.gmra.mxu0 %v2762
    %v2894 = vpop.f32.mrf.mxu0
    %v2895 = vadd.f32 0.0, %v2894
    %2896 = vdwg.mxu0
    %2897 = vmatpush.msra.mxu0 %v2836
    %2898 = vmatpush.msra.mxu0 %v2835
    %2899 = vmatpush.msra.mxu0 %v2834
    %2900 = vmatpush.msra.mxu0 %v2833
    %2901 = vmatpush.msra.mxu0 %v2832
    %2902 = vmatpush.msra.mxu0 %v2831
    %2903 = vmatpush.msra.mxu0 %v2830
    %2904 = vmatpush.msra.mxu0 %v2829
    %2905 = vmatpush.msra.mxu0 %v2828
    %2906 = vmatpush.msra.mxu0 %v2827
    %2907 = vmatpush.msra.mxu0 %v2826
    %2908 = vmatpush.msra.mxu0 %v2825
    %2909 = vmatpush.msra.mxu0 %v2824
    %2910 = vmatpush.msra.mxu0 %v2823
    %2911 = vmatpush.msra.mxu0 %v2822
    %2912 = vmatpush.msra.mxu0 %v2821
    %2913 = vmatmul.f32.gmra.mxu0 %v2764
    %v2914 = vpop.f32.mrf.mxu0
    %v2915 = vadd.f32 0.0, %v2914
    %2916 = vdwg.mxu0
    %v2917 = vrcp.pop %v2766
    %v2918 = vmul.f32 %v2766, %v2917
    %v2919 = vsub.f32 1.0, %v2918
    %v2920 = vmul.f32 %v2917, %v2919
    %v2921 = vadd.f32 %v2917, %v2920
    %vm2922 = vweird.f32 %v2766
    %vm2923 = vweird.f32 %v2917
    %vm2924 = vmor %vm2922, %vm2923
    %v2925 = vsel %vm2924, %v2917, %v2921
    %v2926 = vand.u32 2147483647, %v2766
    %vm2927 = vcmp.eq.f32.partialorder %v2926, 8.507059e+37
    %v2928 = vand.u32 %v2766, 2147483648
    %v2929 = vor.u32 1.1754944e-38, %v2928
    %v2930 = vsel %vm2927, %v2929, %v2925
    %v2931 = vrcp.pop %v2768
    %v2932 = vmul.f32 %v2768, %v2931
    %v2933 = vsub.f32 1.0, %v2932
    %v2934 = vmul.f32 %v2931, %v2933
    %v2935 = vadd.f32 %v2931, %v2934
    %vm2936 = vweird.f32 %v2768
    %vm2937 = vweird.f32 %v2931
    %vm2938 = vmor %vm2936, %vm2937
    %v2939 = vsel %vm2938, %v2931, %v2935
    %v2940 = vand.u32 2147483647, %v2768
    %vm2941 = vcmp.eq.f32.partialorder %v2940, 8.507059e+37
    %v2942 = vand.u32 %v2768, 2147483648
    %v2943 = vor.u32 1.1754944e-38, %v2942
    %v2944 = vsel %vm2941, %v2943, %v2939
    %v2945 = vrcp.pop %v2770
    %v2946 = vmul.f32 %v2770, %v2945
    %v2947 = vsub.f32 1.0, %v2946
    %v2948 = vmul.f32 %v2945, %v2947
    %v2949 = vadd.f32 %v2945, %v2948
    %vm2950 = vweird.f32 %v2770
    %vm2951 = vweird.f32 %v2945
    %vm2952 = vmor %vm2950, %vm2951
    %v2953 = vsel %vm2952, %v2945, %v2949
    %v2954 = vand.u32 2147483647, %v2770
    %vm2955 = vcmp.eq.f32.partialorder %v2954, 8.507059e+37
    %v2956 = vand.u32 %v2770, 2147483648
    %v2957 = vor.u32 1.1754944e-38, %v2956
    %v2958 = vsel %vm2955, %v2957, %v2953
    %v2959 = vrcp.pop %v2772
    %v2960 = vmul.f32 %v2772, %v2959
    %v2961 = vsub.f32 1.0, %v2960
    %v2962 = vmul.f32 %v2959, %v2961
    %v2963 = vadd.f32 %v2959, %v2962
    %vm2964 = vweird.f32 %v2772
    %vm2965 = vweird.f32 %v2959
    %vm2966 = vmor %vm2964, %vm2965
    %v2967 = vsel %vm2966, %v2959, %v2963
    %v2968 = vand.u32 2147483647, %v2772
    %vm2969 = vcmp.eq.f32.partialorder %v2968, 8.507059e+37
    %v2970 = vand.u32 %v2772, 2147483648
    %v2971 = vor.u32 1.1754944e-38, %v2970
    %v2972 = vsel %vm2969, %v2971, %v2967
    %v2973 = vmul.f32 %v2855, %v2930
    %v2974 = vmul.f32 %v2875, %v2944
    %v2975 = vmul.f32 %v2895, %v2958
    %v2976 = vmul.f32 %v2915, %v2972
    %2977 = vst [vmem:[#allocation6] sm:$0xff] %v2973
    %2978 = vst [vmem:[#allocation6 + $0x8] sm:$0xff] %v2974
    %2979 = vst [vmem:[#allocation6 + $0x10] sm:$0xff] %v2975
    %2980 = vst [vmem:[#allocation6 + $0x18] sm:$0xff] %v2976
    // Predicated region
    $region38: #{tpu_custom_call.1} parent=1 // pred_check
      _
    $region39: #{tpu_custom_call.1} parent=1 // pred_check_branch
      %2982 = sbr.rel (0) target = $region41
    $region40: #{tpu_custom_call.1} parent=1 // pred_region
      %2984 = vsyncadd [#allocation5], 0
      %s2985 = sshll.u32 [#allocation6], 4
      %s2986 = int_to_ptr.vmem [resolvable:$true] %s2985
      %s2987 = sshll.u32 %s7, 4
      %s2988 = int_to_ptr.hbm [resolvable:$true] %s2987
      %2993 = dma.vmem_to_hbm [thread:$0]  %s2986, 512, %s2988, [#allocation5], 128, 128, 8
    $region41: #{tpu_custom_call.1} parent=1 // pred_fallthru
      _
    // Predicated region
    $region42: #{tpu_custom_call.1} parent=1 // pred_check
      _
    $region43: #{tpu_custom_call.1} parent=1 // pred_check_branch
      %2995 = sbr.rel (0) target = $region45
    $region44: #{tpu_custom_call.1} parent=1 // pred_region
      %2997 = dma.done [#allocation5], 512
    $region45: #{tpu_custom_call.1} parent=1 // pred_fallthru
      _
    %2998 = vsyncpa [#allocation4], 1
    %2999 = vsyncpa [#allocation5], 1

</llo_original>
